<compile_context>
chip_gen: v6e
topology: v6e:2x2x1
jax: 0.10.0
libtpu: 0.0.40
codegen_flags: <defaults>
</compile_context>

<pallas_src>
import numpy as np
import jax
import jax.numpy as jnp
from jax.experimental import pallas as pl
from jax.experimental.pallas import tpu as pltpu

DIMENSION = 4      # `DIMENSION` global in the reference script
EPS = 1.0          # stands in for `args.eps` in PositiveLinear (keep in sync)

# ---- packed-parameter slab layout (32 rows x 128 lanes, f32) ----------------
SLAB_ROWS = 32
SLAB_COLS = 128
_A_W, _A_B = 0, 8          # A_w (20,8)  [W_xl1; W_xin; W_clinm], c-cols zeroed; A_b (20,1)
_B_W, _B_B = 9, 17         # B_w (28,8)  [W_cp1m; W_xl2; W_xp1; W_cl1m];        B_b (28,1)
_C_W, _C_B = 18, 26        # C_w (13,8)  [W_cpom; W_clom; W_xlo];               C_b (13,1)
_G_W = 27                  # G_w (12,8)  [P1.T; W_cl1.T]
_P1 = 35                   # P1   (8,8)  reparam(W_cp1)
_POUT = 43                 # Pout (1,8)  reparam(W_cpo)
_CLIN = 51                 # W_clin (8,4)
_CL1 = 55                  # W_cl1  (8,4)
_CLO = 59                  # W_clo  (1,4)
_CLIN_T = 63               # W_clin.T (4,8)
_POUT_COL = 71             # Pout.T (8,1)
_AOUT_COL = 72             # W_clo.T (4,1)


def dissipation_kernel(sc_ref, slab_ref, out_ref):
    f32 = jnp.float32
    D = DIMENSION

    sc = sc_ref[...]          # (8, TB): rows 0:D = state_conjugate, rows D:2D = state
    slab = slab_ref[...]      # (32, 128)
    c = sc[0:D, :]            # (D, TB)

    def blk(r1, c0, c1):      # static slice of the parameter slab, rows [0:r1)
        return slab[0:r1, c0:c1]

    def mm(Wm, x):            # (o, i) @ (i, TB) -> (o, TB), f32 accumulate
        return jax.lax.dot_general(Wm, x, (((1,), (0,)), ((), ())),
                                   preferred_element_type=f32)

    def softplus(u):
        e = jnp.exp(-jnp.abs(u))
        return jnp.maximum(u, 0.0) + jnp.log(1.0 + e)

    def softplus_sigmoid(u):  # share exp(-|u|) between softplus and sigmoid
        e = jnp.exp(-jnp.abs(u))
        inv = 1.0 / (1.0 + e)
        sp = jnp.maximum(u, 0.0) + jnp.log(1.0 + e)
        sg = jnp.where(u >= 0.0, inv, e * inv)
        return sp, sg

    # ---- stage A: stacked matmul on the packed [c; s] tile (c-cols zeroed) --
    yA = mm(blk(20, _A_W, _A_W + 8), sc) + blk(20, _A_B, _A_B + 1)   # (20, TB)
    a1   = yA[0:8, :]                        # x_lateral_layer_1(s)
    x1   = softplus(yA[8:16, :])             # softplus(x_input_layer(s))
    m_in = yA[16:20, :]                      # conjugate_lateral_layer_in_mid(s)

    # ---- stage B: stacked matmul on x1 --------------------------------------
    yB = mm(blk(28, _B_W, _B_W + 8), x1) + blk(28, _B_B, _B_B + 1)   # (28, TB)
    p1m = softplus(yB[0:8, :])               # softplus(conjugate_prop_layer_1_mid(x1))
    a2  = yB[8:16, :]                        # x_lateral_layer_2(x1)
    x2  = softplus(yB[16:24, :])             # softplus(x_prop_layer1(x1))
    m1  = yB[24:28, :]                       # conjugate_lateral_layer_1_mid(x1)

    # ---- stage C: stacked matmul on x2 --------------------------------------
    yC = mm(blk(13, _C_W, _C_W + 8), x2) + blk(13, _C_B, _C_B + 1)   # (13, TB)
    poutm = softplus(yC[0:8, :])             # softplus(conjugate_prop_layer_out_mid(x2))
    mout  = yC[8:12, :]                      # conjugate_lateral_layer_out_mid(x2)
    a3    = yC[12:13, :]                     # x_lateral_layer_out(x2)

    P1w = blk(8, _P1, _P1 + 8)               # (8, 8)
    Poutw = blk(1, _POUT, _POUT + 8)         # (1, 8)

    # ---- zero branch (state_conjugate = 0); zero terms dropped --------------
    xs1z, sig1 = softplus_sigmoid(a1)
    u2z = a2 + mm(P1w, xs1z * p1m)
    xs2z, sig2 = softplus_sigmoid(u2z)

    # ---- conjugate branch ----------------------------------------------------
    cin = mm(blk(8, _CLIN, _CLIN + D), c * m_in)          # (8, TB)
    xs1c = softplus(a1 + cin)
    c1 = mm(blk(8, _CL1, _CL1 + D), c * m1)               # (8, TB)
    u2c = a2 + mm(P1w, xs1c * p1m) + c1
    xs2c = softplus(u2c)
    cout = mm(blk(1, _CLO, _CLO + D), c * mout)           # (1, TB)

    u3z = a3 + mm(Poutw, xs2z * poutm)                    # (1, TB)
    u3c = a3 + mm(Poutw, xs2c * poutm) + cout             # (1, TB)

    # densify the final EUP pass: stack u3z / u3c into one (2, TB) tile
    rows2 = jax.lax.broadcasted_iota(jnp.int32, (2, 1), 0)
    u3 = jnp.where(rows2 == 0, u3z, u3c)                  # (2, TB)
    sp3, sg3 = softplus_sigmoid(u3)
    Xi0    = sp3[0:1, :]                                  # softplus(u3z)
    Xi_raw = sp3[1:2, :]                                  # softplus(u3c)
    sig3   = sg3[0:1, :]                                  # sigmoid(u3z)

    # ---- analytic d Xi_at_zero / d state_conjugate (replaces autograd.grad) -
    pout_col = blk(8, _POUT_COL, _POUT_COL + 1)           # (8, 1) = Pout^T
    aout_col = blk(D, _AOUT_COL, _AOUT_COL + 1)           # (4, 1) = W_clo^T
    w2 = poutm * sig2 * pout_col                          # (8, TB)
    yG = mm(blk(12, _G_W, _G_W + 8), w2)                  # (12, TB)
    inner = yG[0:8, :] * p1m * sig1                       # (P1^T @ w2) * p1m * sig1
    t2raw = yG[8:12, :]                                   # W_cl1^T @ w2
    t3raw = mm(blk(D, _CLIN_T, _CLIN_T + 8), inner)       # W_clin^T @ inner, (4, TB)
    grad0 = sig3 * (mout * aout_col + m1 * t2raw + m_in * t3raw)   # (4, TB)

    corr = jnp.sum(c * grad0, axis=0, keepdims=True)      # (1, TB)
    out_ref[...] = (Xi_raw - Xi0 - corr).astype(out_ref.dtype)


# ---------------------------- parameter packing ------------------------------
def _pack_slab(p):
    """Pack all weights / biases (stacked per consuming activation), the
    PositiveLinear reparameterizations and the gradient transposes into one
    (32, 128) f32 slab."""
    f32 = jnp.float32
    eps = jnp.asarray(EPS, f32)
    rep = lambda W: jnp.where(W >= 0, W.astype(f32) + jnp.exp(-eps),
                              jnp.exp(W.astype(f32) - eps))
    P1 = rep(p["W_cp1"])
    Pout = rep(p["W_cpo"])

    cat = lambda *ms: jnp.concatenate([m.astype(f32) for m in ms], axis=0)
    colv = lambda *vs: jnp.concatenate(
        [jnp.ravel(v).astype(f32) for v in vs])[:, None]

    # stage A consumes the packed [c; s] tile -> zero weight columns for c
    A_s = cat(p["W_xl1"], p["W_xin"], p["W_clinm"])                   # (20, 4)
    A_w = jnp.concatenate([jnp.zeros_like(A_s), A_s], axis=1)         # (20, 8)
    A_b = colv(p["b_xl1"], p["b_xin"], p["b_clinm"])                  # (20, 1)
    B_w = cat(p["W_cp1m"], p["W_xl2"], p["W_xp1"], p["W_cl1m"])       # (28, 8)
    B_b = colv(p["b_cp1m"], p["b_xl2"], p["b_xp1"], p["b_cl1m"])      # (28, 1)
    C_w = cat(p["W_cpom"], p["W_clom"], p["W_xlo"])                   # (13, 8)
    C_b = colv(p["b_cpom"], p["b_clom"], p["b_xlo"])                  # (13, 1)
    G_w = cat(P1.T, p["W_cl1"].T)                                     # (12, 8)

    blocks = [(A_w, _A_W), (A_b, _A_B), (B_w, _B_W), (B_b, _B_B),
              (C_w, _C_W), (C_b, _C_B), (G_w, _G_W), (P1, _P1),
              (Pout, _POUT), (p["W_clin"], _CLIN), (p["W_cl1"], _CL1),
              (p["W_clo"], _CLO), (p["W_clin"].T, _CLIN_T),
              (Pout.T, _POUT_COL), (p["W_clo"].T, _AOUT_COL)]
    slab = jnp.zeros((SLAB_ROWS, SLAB_COLS), f32)
    for M, c0 in blocks:
        M = M.astype(f32)
        o, i = M.shape
        slab = slab.at[:o, c0:c0 + i].set(M)
    return slab


def init_params(key):
    """Deterministic kaiming-normal weights, zero biases (matches __init__)."""
    ks = jax.random.split(key, 15)

    def kn(k, o, i):
        return (jax.random.normal(k, (o, i), jnp.float32)
                * np.sqrt(2.0 / i)).astype(jnp.float32)

    D = DIMENSION
    z = lambda n: jnp.zeros((1, n), jnp.float32)
    p = {}
    p["W_xin"], p["b_xin"] = kn(ks[0], 8, D), z(8)       # x_input_layer
    p["W_xp1"], p["b_xp1"] = kn(ks[1], 8, 8), z(8)       # x_prop_layer1
    p["W_xl1"], p["b_xl1"] = kn(ks[2], 8, D), z(8)       # x_lateral_layer_1
    p["W_xl2"], p["b_xl2"] = kn(ks[3], 8, 8), z(8)       # x_lateral_layer_2
    p["W_xlo"], p["b_xlo"] = kn(ks[4], 1, 8), z(1)       # x_lateral_layer_out
    p["W_cp1"] = kn(ks[5], 8, 8)                         # conjugate_prop_layer_1 (PositiveLinear)
    p["W_cpo"] = kn(ks[6], 1, 8)                         # conjugate_prop_layer_out (PositiveLinear)
    p["W_cp1m"], p["b_cp1m"] = kn(ks[7], 8, 8), z(8)     # conjugate_prop_layer_1_mid
    p["W_cpom"], p["b_cpom"] = kn(ks[8], 8, 8), z(8)     # conjugate_prop_layer_out_mid
    p["W_clin"] = kn(ks[9], 8, D)                        # conjugate_lateral_layer_in
    p["W_cl1"] = kn(ks[10], 8, D)                        # conjugate_lateral_layer_1
    p["W_clo"] = kn(ks[11], 1, D)                        # conjugate_lateral_layer_out
    p["W_clinm"], p["b_clinm"] = kn(ks[12], D, D), z(D)  # conjugate_lateral_layer_in_mid
    p["W_cl1m"], p["b_cl1m"] = kn(ks[13], D, 8), z(D)    # conjugate_lateral_layer_1_mid
    p["W_clom"], p["b_clom"] = kn(ks[14], D, 8), z(D)    # conjugate_lateral_layer_out_mid
    return p


def _round_up(x, m):
    return ((x + m - 1) // m) * m


def dissipation_forward(params, state, state_conjugate, tb=None):
    """Forward pass. state / state_conjugate: [B, DIMENSION] -> Xi: [B, 1]."""
    f32 = jnp.float32
    B, D = state.shape
    assert D == DIMENSION
    if tb is None:
        # >= 2 grid steps whenever possible (v7x: one per TensorCore), capped
        # at 2048 lanes per step (per-step VMEM stays far below any limit).
        tb = max(128, min(2048, _round_up(pl.cdiv(B, 2), 128)))
    assert tb % 128 == 0, "batch tile must be lane-dense (multiple of 128)"
    n_tiles = pl.cdiv(B, tb)
    B_pad = n_tiles * tb

    # ONE fused relayout: pack [conjugate; state] batch-on-lanes, pad the tail.
    # Padded tail lanes run the full network on zeros and are sliced off below
    # (benign: the kernel never reduces over the batch/lane axis).
    sc = jnp.concatenate([state_conjugate.astype(f32).T,
                          state.astype(f32).T], axis=0)        # (2D, B)
    if B_pad != B:
        sc = jnp.pad(sc, ((0, 0), (0, B_pad - B)))
    slab = _pack_slab(params)

    out = pl.pallas_call(
        dissipation_kernel,
        out_shape=jax.ShapeDtypeStruct((1, B_pad), f32),
        grid=(n_tiles,),
        in_specs=[
            pl.BlockSpec((2 * D, tb), lambda i: (0, i)),
            pl.BlockSpec((SLAB_ROWS, SLAB_COLS), lambda i: (0, 0)),
        ],
        out_specs=pl.BlockSpec((1, tb), lambda i: (0, i)),
        compiler_params=pltpu.CompilerParams(dimension_semantics=("parallel",)),
    )(sc, slab)
    return out[0, :B][:, None]   # back to PyTorch layout [B, 1]


# ---------------- pure-JAX reference (for correctness check) ----------------
def _forward_raw_ref(p, s, c):
    sp = lambda x: jnp.logaddexp(x, 0.0)
    lin = lambda x, W, b=None: x @ W.T + (b if b is not None else 0.0)
    rep = lambda W: jnp.where(W >= 0, W + jnp.exp(jnp.float32(-EPS)),
                              jnp.exp(W - jnp.float32(EPS)))
    m_in = lin(s, p["W_clinm"], p["b_clinm"])
    xs1 = sp(lin(s, p["W_xl1"], p["b_xl1"]) + lin(c * m_in, p["W_clin"]))
    x1 = sp(lin(s, p["W_xin"], p["b_xin"]))
    p1m = sp(lin(x1, p["W_cp1m"], p["b_cp1m"]))
    m1 = lin(x1, p["W_cl1m"], p["b_cl1m"])
    xs2 = sp(lin(x1, p["W_xl2"], p["b_xl2"])
             + (xs1 * p1m) @ rep(p["W_cp1"]).T
             + lin(c * m1, p["W_cl1"]))
    x2 = sp(lin(x1, p["W_xp1"], p["b_xp1"]))
    poutm = sp(lin(x2, p["W_cpom"], p["b_cpom"]))
    mout = lin(x2, p["W_clom"], p["b_clom"])
    u3 = (lin(x2, p["W_xlo"], p["b_xlo"])
          + (xs2 * poutm) @ rep(p["W_cpo"]).T
          + lin(c * mout, p["W_clo"]))
    return sp(u3)


def dissipation_ref(p, s, c):
    Xi_raw = _forward_raw_ref(p, s, c)
    Xi0, vjp_fn = jax.vjp(lambda cz: _forward_raw_ref(p, s, cz), jnp.zeros_like(c))
    g, = vjp_fn(jnp.ones_like(Xi0))
    return Xi_raw - Xi0 - jnp.sum(c * g, axis=-1, keepdims=True)


if __name__ == "__main__":
    key = jax.random.PRNGKey(0)
    kp, ks, kc = jax.random.split(key, 3)
    params = init_params(kp)

    B = 256
    state = jax.random.normal(ks, (B, DIMENSION), jnp.float32)
    state_conjugate = jax.random.normal(kc, (B, DIMENSION), jnp.float32)

    # default tb -> 128 here, giving a 2-step parallel grid (v7x: one per TC).
    xi = dissipation_forward(params, state, state_conjugate)
    xi = jax.block_until_ready(xi)

    xi_ref = jax.block_until_ready(dissipation_ref(params, state, state_conjugate))
    np.testing.assert_allclose(np.asarray(xi), np.asarray(xi_ref),
                               rtol=1e-4, atol=1e-4)
    print("KERNEL_OK")
</pallas_src>

<mosaic_0001>
module attributes {stable_mosaic.version = 11 : i64} {
  func.func @dissipation_kernel(%arg0: i32, %arg1: memref<8x128xf32, #tpu.memory_space<vmem>>, %arg2: memref<32x128xf32, #tpu.memory_space<vmem>>, %arg3: memref<1x128xf32, #tpu.memory_space<vmem>>) attributes {dimension_semantics = [#tpu.dimension_semantics<parallel>], iteration_bounds = array<i64: 2>, scalar_prefetch = 0 : i64, scratch_operands = 0 : i64, tpu.core_type = #tpu.core_type<tc>, window_params = [{transform_indices = @transform_0, window_bounds = array<i64: 8, 128>}, {pipeline_mode = #tpu.pipeline_mode<synchronous>, transform_indices = @transform_1, window_bounds = array<i64: 32, 128>}, {transform_indices = @transform_2, window_bounds = array<i64: 1, 128>}]} {
    %c0 = arith.constant 0 : index
    %c0_0 = arith.constant 0 : index
    %0 = vector.load %arg1[%c0, %c0_0] : memref<8x128xf32, #tpu.memory_space<vmem>>, vector<8x128xf32>
    %c0_1 = arith.constant 0 : index
    %c0_2 = arith.constant 0 : index
    %1 = vector.load %arg2[%c0_1, %c0_2] : memref<32x128xf32, #tpu.memory_space<vmem>>, vector<32x128xf32>
    %2 = vector.extract_strided_slice %0 {offsets = [0, 0], sizes = [4, 128], strides = [1, 1]} : vector<8x128xf32> to vector<4x128xf32>
    %3 = vector.extract_strided_slice %1 {offsets = [0, 0], sizes = [20, 8], strides = [1, 1]} : vector<32x128xf32> to vector<20x8xf32>
    %cst = arith.constant dense<0.000000e+00> : vector<20x128xf32>
    %4 = tpu.matmul %3, %0, %cst {dimension_numbers = #tpu.dot_dimension_numbers<[1], [0], [0], [1], [0, 0, 1, 1], [], []>} : vector<20x8xf32>, vector<8x128xf32>, vector<20x128xf32> -> vector<20x128xf32>
    %5 = vector.extract_strided_slice %1 {offsets = [0, 8], sizes = [20, 1], strides = [1, 1]} : vector<32x128xf32> to vector<20x1xf32>
    %6 = vector.broadcast %5 : vector<20x1xf32> to vector<20x128xf32>
    %7 = arith.addf %4, %6 : vector<20x128xf32>
    %8 = vector.extract_strided_slice %7 {offsets = [0, 0], sizes = [8, 128], strides = [1, 1]} : vector<20x128xf32> to vector<8x128xf32>
    %9 = vector.extract_strided_slice %7 {offsets = [8, 0], sizes = [8, 128], strides = [1, 1]} : vector<20x128xf32> to vector<8x128xf32>
    %10 = math.absf %9 : vector<8x128xf32>
    %cst_3 = arith.constant 0.000000e+00 : f32
    %11 = vector.broadcast %cst_3 : f32 to vector<8x128xf32>
    %12 = arith.subf %11, %10 : vector<8x128xf32>
    %13 = math.exp %12 : vector<8x128xf32>
    %cst_4 = arith.constant 0.000000e+00 : f32
    %14 = vector.broadcast %cst_4 : f32 to vector<8x128xf32>
    %15 = arith.maximumf %9, %14 : vector<8x128xf32>
    %cst_5 = arith.constant 1.000000e+00 : f32
    %16 = vector.broadcast %cst_5 : f32 to vector<8x128xf32>
    %17 = arith.addf %16, %13 : vector<8x128xf32>
    %18 = math.log %17 : vector<8x128xf32>
    %19 = arith.addf %15, %18 : vector<8x128xf32>
    %20 = vector.extract_strided_slice %7 {offsets = [16, 0], sizes = [4, 128], strides = [1, 1]} : vector<20x128xf32> to vector<4x128xf32>
    %21 = vector.extract_strided_slice %1 {offsets = [0, 9], sizes = [28, 8], strides = [1, 1]} : vector<32x128xf32> to vector<28x8xf32>
    %cst_6 = arith.constant dense<0.000000e+00> : vector<28x128xf32>
    %22 = tpu.matmul %21, %19, %cst_6 {dimension_numbers = #tpu.dot_dimension_numbers<[1], [0], [0], [1], [0, 0, 1, 1], [], []>} : vector<28x8xf32>, vector<8x128xf32>, vector<28x128xf32> -> vector<28x128xf32>
    %23 = vector.extract_strided_slice %1 {offsets = [0, 17], sizes = [28, 1], strides = [1, 1]} : vector<32x128xf32> to vector<28x1xf32>
    %24 = vector.broadcast %23 : vector<28x1xf32> to vector<28x128xf32>
    %25 = arith.addf %22, %24 : vector<28x128xf32>
    %26 = vector.extract_strided_slice %25 {offsets = [0, 0], sizes = [8, 128], strides = [1, 1]} : vector<28x128xf32> to vector<8x128xf32>
    %27 = math.absf %26 : vector<8x128xf32>
    %cst_7 = arith.constant 0.000000e+00 : f32
    %28 = vector.broadcast %cst_7 : f32 to vector<8x128xf32>
    %29 = arith.subf %28, %27 : vector<8x128xf32>
    %30 = math.exp %29 : vector<8x128xf32>
    %cst_8 = arith.constant 0.000000e+00 : f32
    %31 = vector.broadcast %cst_8 : f32 to vector<8x128xf32>
    %32 = arith.maximumf %26, %31 : vector<8x128xf32>
    %cst_9 = arith.constant 1.000000e+00 : f32
    %33 = vector.broadcast %cst_9 : f32 to vector<8x128xf32>
    %34 = arith.addf %33, %30 : vector<8x128xf32>
    %35 = math.log %34 : vector<8x128xf32>
    %36 = arith.addf %32, %35 : vector<8x128xf32>
    %37 = vector.extract_strided_slice %25 {offsets = [8, 0], sizes = [8, 128], strides = [1, 1]} : vector<28x128xf32> to vector<8x128xf32>
    %38 = vector.extract_strided_slice %25 {offsets = [16, 0], sizes = [8, 128], strides = [1, 1]} : vector<28x128xf32> to vector<8x128xf32>
    %39 = math.absf %38 : vector<8x128xf32>
    %cst_10 = arith.constant 0.000000e+00 : f32
    %40 = vector.broadcast %cst_10 : f32 to vector<8x128xf32>
    %41 = arith.subf %40, %39 : vector<8x128xf32>
    %42 = math.exp %41 : vector<8x128xf32>
    %cst_11 = arith.constant 0.000000e+00 : f32
    %43 = vector.broadcast %cst_11 : f32 to vector<8x128xf32>
    %44 = arith.maximumf %38, %43 : vector<8x128xf32>
    %cst_12 = arith.constant 1.000000e+00 : f32
    %45 = vector.broadcast %cst_12 : f32 to vector<8x128xf32>
    %46 = arith.addf %45, %42 : vector<8x128xf32>
    %47 = math.log %46 : vector<8x128xf32>
    %48 = arith.addf %44, %47 : vector<8x128xf32>
    %49 = vector.extract_strided_slice %25 {offsets = [24, 0], sizes = [4, 128], strides = [1, 1]} : vector<28x128xf32> to vector<4x128xf32>
    %50 = vector.extract_strided_slice %1 {offsets = [0, 18], sizes = [13, 8], strides = [1, 1]} : vector<32x128xf32> to vector<13x8xf32>
    %cst_13 = arith.constant dense<0.000000e+00> : vector<13x128xf32>
    %51 = tpu.matmul %50, %48, %cst_13 {dimension_numbers = #tpu.dot_dimension_numbers<[1], [0], [0], [1], [0, 0, 1, 1], [], []>} : vector<13x8xf32>, vector<8x128xf32>, vector<13x128xf32> -> vector<13x128xf32>
    %52 = vector.extract_strided_slice %1 {offsets = [0, 26], sizes = [13, 1], strides = [1, 1]} : vector<32x128xf32> to vector<13x1xf32>
    %53 = vector.broadcast %52 : vector<13x1xf32> to vector<13x128xf32>
    %54 = arith.addf %51, %53 : vector<13x128xf32>
    %55 = vector.extract_strided_slice %54 {offsets = [0, 0], sizes = [8, 128], strides = [1, 1]} : vector<13x128xf32> to vector<8x128xf32>
    %56 = math.absf %55 : vector<8x128xf32>
    %cst_14 = arith.constant 0.000000e+00 : f32
    %57 = vector.broadcast %cst_14 : f32 to vector<8x128xf32>
    %58 = arith.subf %57, %56 : vector<8x128xf32>
    %59 = math.exp %58 : vector<8x128xf32>
    %cst_15 = arith.constant 0.000000e+00 : f32
    %60 = vector.broadcast %cst_15 : f32 to vector<8x128xf32>
    %61 = arith.maximumf %55, %60 : vector<8x128xf32>
    %cst_16 = arith.constant 1.000000e+00 : f32
    %62 = vector.broadcast %cst_16 : f32 to vector<8x128xf32>
    %63 = arith.addf %62, %59 : vector<8x128xf32>
    %64 = math.log %63 : vector<8x128xf32>
    %65 = arith.addf %61, %64 : vector<8x128xf32>
    %66 = vector.extract_strided_slice %54 {offsets = [8, 0], sizes = [4, 128], strides = [1, 1]} : vector<13x128xf32> to vector<4x128xf32>
    %67 = vector.extract_strided_slice %54 {offsets = [12, 0], sizes = [1, 128], strides = [1, 1]} : vector<13x128xf32> to vector<1x128xf32>
    %68 = vector.extract_strided_slice %1 {offsets = [0, 35], sizes = [8, 8], strides = [1, 1]} : vector<32x128xf32> to vector<8x8xf32>
    %69 = vector.extract_strided_slice %1 {offsets = [0, 43], sizes = [1, 8], strides = [1, 1]} : vector<32x128xf32> to vector<1x8xf32>
    %70 = math.absf %8 : vector<8x128xf32>
    %cst_17 = arith.constant 0.000000e+00 : f32
    %71 = vector.broadcast %cst_17 : f32 to vector<8x128xf32>
    %72 = arith.subf %71, %70 : vector<8x128xf32>
    %73 = math.exp %72 : vector<8x128xf32>
    %cst_18 = arith.constant 1.000000e+00 : f32
    %74 = vector.broadcast %cst_18 : f32 to vector<8x128xf32>
    %75 = arith.addf %74, %73 : vector<8x128xf32>
    %cst_19 = arith.constant 1.000000e+00 : f32
    %76 = vector.broadcast %cst_19 : f32 to vector<8x128xf32>
    %77 = arith.divf %76, %75 : vector<8x128xf32>
    %cst_20 = arith.constant 0.000000e+00 : f32
    %78 = vector.broadcast %cst_20 : f32 to vector<8x128xf32>
    %79 = arith.maximumf %8, %78 : vector<8x128xf32>
    %cst_21 = arith.constant 1.000000e+00 : f32
    %80 = vector.broadcast %cst_21 : f32 to vector<8x128xf32>
    %81 = arith.addf %80, %73 : vector<8x128xf32>
    %82 = math.log %81 : vector<8x128xf32>
    %83 = arith.addf %79, %82 : vector<8x128xf32>
    %cst_22 = arith.constant 0.000000e+00 : f32
    %84 = vector.broadcast %cst_22 : f32 to vector<8x128xf32>
    %85 = arith.cmpf oge, %8, %84 : vector<8x128xf32>
    %86 = arith.mulf %73, %77 : vector<8x128xf32>
    %87 = arith.select %85, %77, %86 : vector<8x128xi1>, vector<8x128xf32>
    %88 = arith.mulf %83, %36 : vector<8x128xf32>
    %cst_23 = arith.constant dense<0.000000e+00> : vector<8x128xf32>
    %89 = tpu.matmul %68, %88, %cst_23 {dimension_numbers = #tpu.dot_dimension_numbers<[1], [0], [0], [1], [0, 0, 1, 1], [], []>} : vector<8x8xf32>, vector<8x128xf32>, vector<8x128xf32> -> vector<8x128xf32>
    %90 = arith.addf %37, %89 : vector<8x128xf32>
    %91 = math.absf %90 : vector<8x128xf32>
    %cst_24 = arith.constant 0.000000e+00 : f32
    %92 = vector.broadcast %cst_24 : f32 to vector<8x128xf32>
    %93 = arith.subf %92, %91 : vector<8x128xf32>
    %94 = math.exp %93 : vector<8x128xf32>
    %cst_25 = arith.constant 1.000000e+00 : f32
    %95 = vector.broadcast %cst_25 : f32 to vector<8x128xf32>
    %96 = arith.addf %95, %94 : vector<8x128xf32>
    %cst_26 = arith.constant 1.000000e+00 : f32
    %97 = vector.broadcast %cst_26 : f32 to vector<8x128xf32>
    %98 = arith.divf %97, %96 : vector<8x128xf32>
    %cst_27 = arith.constant 0.000000e+00 : f32
    %99 = vector.broadcast %cst_27 : f32 to vector<8x128xf32>
    %100 = arith.maximumf %90, %99 : vector<8x128xf32>
    %cst_28 = arith.constant 1.000000e+00 : f32
    %101 = vector.broadcast %cst_28 : f32 to vector<8x128xf32>
    %102 = arith.addf %101, %94 : vector<8x128xf32>
    %103 = math.log %102 : vector<8x128xf32>
    %104 = arith.addf %100, %103 : vector<8x128xf32>
    %cst_29 = arith.constant 0.000000e+00 : f32
    %105 = vector.broadcast %cst_29 : f32 to vector<8x128xf32>
    %106 = arith.cmpf oge, %90, %105 : vector<8x128xf32>
    %107 = arith.mulf %94, %98 : vector<8x128xf32>
    %108 = arith.select %106, %98, %107 : vector<8x128xi1>, vector<8x128xf32>
    %109 = vector.extract_strided_slice %1 {offsets = [0, 51], sizes = [8, 4], strides = [1, 1]} : vector<32x128xf32> to vector<8x4xf32>
    %110 = arith.mulf %2, %20 : vector<4x128xf32>
    %cst_30 = arith.constant dense<0.000000e+00> : vector<8x128xf32>
    %111 = tpu.matmul %109, %110, %cst_30 {dimension_numbers = #tpu.dot_dimension_numbers<[1], [0], [0], [1], [0, 0, 1, 1], [], []>} : vector<8x4xf32>, vector<4x128xf32>, vector<8x128xf32> -> vector<8x128xf32>
    %112 = arith.addf %8, %111 : vector<8x128xf32>
    %113 = math.absf %112 : vector<8x128xf32>
    %cst_31 = arith.constant 0.000000e+00 : f32
    %114 = vector.broadcast %cst_31 : f32 to vector<8x128xf32>
    %115 = arith.subf %114, %113 : vector<8x128xf32>
    %116 = math.exp %115 : vector<8x128xf32>
    %cst_32 = arith.constant 0.000000e+00 : f32
    %117 = vector.broadcast %cst_32 : f32 to vector<8x128xf32>
    %118 = arith.maximumf %112, %117 : vector<8x128xf32>
    %cst_33 = arith.constant 1.000000e+00 : f32
    %119 = vector.broadcast %cst_33 : f32 to vector<8x128xf32>
    %120 = arith.addf %119, %116 : vector<8x128xf32>
    %121 = math.log %120 : vector<8x128xf32>
    %122 = arith.addf %118, %121 : vector<8x128xf32>
    %123 = vector.extract_strided_slice %1 {offsets = [0, 55], sizes = [8, 4], strides = [1, 1]} : vector<32x128xf32> to vector<8x4xf32>
    %124 = arith.mulf %2, %49 : vector<4x128xf32>
    %cst_34 = arith.constant dense<0.000000e+00> : vector<8x128xf32>
    %125 = tpu.matmul %123, %124, %cst_34 {dimension_numbers = #tpu.dot_dimension_numbers<[1], [0], [0], [1], [0, 0, 1, 1], [], []>} : vector<8x4xf32>, vector<4x128xf32>, vector<8x128xf32> -> vector<8x128xf32>
    %126 = arith.mulf %122, %36 : vector<8x128xf32>
    %cst_35 = arith.constant dense<0.000000e+00> : vector<8x128xf32>
    %127 = tpu.matmul %68, %126, %cst_35 {dimension_numbers = #tpu.dot_dimension_numbers<[1], [0], [0], [1], [0, 0, 1, 1], [], []>} : vector<8x8xf32>, vector<8x128xf32>, vector<8x128xf32> -> vector<8x128xf32>
    %128 = arith.addf %37, %127 : vector<8x128xf32>
    %129 = arith.addf %128, %125 : vector<8x128xf32>
    %130 = math.absf %129 : vector<8x128xf32>
    %cst_36 = arith.constant 0.000000e+00 : f32
    %131 = vector.broadcast %cst_36 : f32 to vector<8x128xf32>
    %132 = arith.subf %131, %130 : vector<8x128xf32>
    %133 = math.exp %132 : vector<8x128xf32>
    %cst_37 = arith.constant 0.000000e+00 : f32
    %134 = vector.broadcast %cst_37 : f32 to vector<8x128xf32>
    %135 = arith.maximumf %129, %134 : vector<8x128xf32>
    %cst_38 = arith.constant 1.000000e+00 : f32
    %136 = vector.broadcast %cst_38 : f32 to vector<8x128xf32>
    %137 = arith.addf %136, %133 : vector<8x128xf32>
    %138 = math.log %137 : vector<8x128xf32>
    %139 = arith.addf %135, %138 : vector<8x128xf32>
    %140 = vector.extract_strided_slice %1 {offsets = [0, 59], sizes = [1, 4], strides = [1, 1]} : vector<32x128xf32> to vector<1x4xf32>
    %141 = arith.mulf %2, %66 : vector<4x128xf32>
    %cst_39 = arith.constant dense<0.000000e+00> : vector<1x128xf32>
    %142 = tpu.matmul %140, %141, %cst_39 {dimension_numbers = #tpu.dot_dimension_numbers<[1], [0], [0], [1], [0, 0, 1, 1], [], []>} : vector<1x4xf32>, vector<4x128xf32>, vector<1x128xf32> -> vector<1x128xf32>
    %143 = arith.mulf %104, %65 : vector<8x128xf32>
    %cst_40 = arith.constant dense<0.000000e+00> : vector<1x128xf32>
    %144 = tpu.matmul %69, %143, %cst_40 {dimension_numbers = #tpu.dot_dimension_numbers<[1], [0], [0], [1], [0, 0, 1, 1], [], []>} : vector<1x8xf32>, vector<8x128xf32>, vector<1x128xf32> -> vector<1x128xf32>
    %145 = arith.addf %67, %144 : vector<1x128xf32>
    %146 = arith.mulf %139, %65 : vector<8x128xf32>
    %cst_41 = arith.constant dense<0.000000e+00> : vector<1x128xf32>
    %147 = tpu.matmul %69, %146, %cst_41 {dimension_numbers = #tpu.dot_dimension_numbers<[1], [0], [0], [1], [0, 0, 1, 1], [], []>} : vector<1x8xf32>, vector<8x128xf32>, vector<1x128xf32> -> vector<1x128xf32>
    %148 = arith.addf %67, %147 : vector<1x128xf32>
    %149 = arith.addf %148, %142 : vector<1x128xf32>
    %150 = tpu.iota {dimensions = array<i32: 0>} : vector<2x1xi32>
    %c0_i32 = arith.constant 0 : i32
    %151 = vector.broadcast %c0_i32 : i32 to vector<2x1xi32>
    %152 = arith.cmpi eq, %150, %151 : vector<2x1xi32>
    %153 = vector.shape_cast %152 : vector<2x1xi1> to vector<2x1xi1>
    %154 = vector.broadcast %153 : vector<2x1xi1> to vector<2x128xi1>
    %155 = vector.shape_cast %145 : vector<1x128xf32> to vector<1x128xf32>
    %156 = vector.broadcast %155 : vector<1x128xf32> to vector<2x128xf32>
    %157 = vector.shape_cast %149 : vector<1x128xf32> to vector<1x128xf32>
    %158 = vector.broadcast %157 : vector<1x128xf32> to vector<2x128xf32>
    %159 = arith.select %154, %156, %158 : vector<2x128xi1>, vector<2x128xf32>
    %160 = math.absf %159 : vector<2x128xf32>
    %cst_42 = arith.constant 0.000000e+00 : f32
    %161 = vector.broadcast %cst_42 : f32 to vector<2x128xf32>
    %162 = arith.subf %161, %160 : vector<2x128xf32>
    %163 = math.exp %162 : vector<2x128xf32>
    %cst_43 = arith.constant 1.000000e+00 : f32
    %164 = vector.broadcast %cst_43 : f32 to vector<2x128xf32>
    %165 = arith.addf %164, %163 : vector<2x128xf32>
    %cst_44 = arith.constant 1.000000e+00 : f32
    %166 = vector.broadcast %cst_44 : f32 to vector<2x128xf32>
    %167 = arith.divf %166, %165 : vector<2x128xf32>
    %cst_45 = arith.constant 0.000000e+00 : f32
    %168 = vector.broadcast %cst_45 : f32 to vector<2x128xf32>
    %169 = arith.maximumf %159, %168 : vector<2x128xf32>
    %cst_46 = arith.constant 1.000000e+00 : f32
    %170 = vector.broadcast %cst_46 : f32 to vector<2x128xf32>
    %171 = arith.addf %170, %163 : vector<2x128xf32>
    %172 = math.log %171 : vector<2x128xf32>
    %173 = arith.addf %169, %172 : vector<2x128xf32>
    %cst_47 = arith.constant 0.000000e+00 : f32
    %174 = vector.broadcast %cst_47 : f32 to vector<2x128xf32>
    %175 = arith.cmpf oge, %159, %174 : vector<2x128xf32>
    %176 = arith.mulf %163, %167 : vector<2x128xf32>
    %177 = arith.select %175, %167, %176 : vector<2x128xi1>, vector<2x128xf32>
    %178 = vector.extract_strided_slice %173 {offsets = [0, 0], sizes = [1, 128], strides = [1, 1]} : vector<2x128xf32> to vector<1x128xf32>
    %179 = vector.extract_strided_slice %173 {offsets = [1, 0], sizes = [1, 128], strides = [1, 1]} : vector<2x128xf32> to vector<1x128xf32>
    %180 = vector.extract_strided_slice %177 {offsets = [0, 0], sizes = [1, 128], strides = [1, 1]} : vector<2x128xf32> to vector<1x128xf32>
    %181 = vector.extract_strided_slice %1 {offsets = [0, 71], sizes = [8, 1], strides = [1, 1]} : vector<32x128xf32> to vector<8x1xf32>
    %182 = vector.extract_strided_slice %1 {offsets = [0, 72], sizes = [4, 1], strides = [1, 1]} : vector<32x128xf32> to vector<4x1xf32>
    %183 = arith.mulf %65, %108 : vector<8x128xf32>
    %184 = vector.broadcast %181 : vector<8x1xf32> to vector<8x128xf32>
    %185 = arith.mulf %183, %184 : vector<8x128xf32>
    %186 = vector.extract_strided_slice %1 {offsets = [0, 27], sizes = [12, 8], strides = [1, 1]} : vector<32x128xf32> to vector<12x8xf32>
    %cst_48 = arith.constant dense<0.000000e+00> : vector<12x128xf32>
    %187 = tpu.matmul %186, %185, %cst_48 {dimension_numbers = #tpu.dot_dimension_numbers<[1], [0], [0], [1], [0, 0, 1, 1], [], []>} : vector<12x8xf32>, vector<8x128xf32>, vector<12x128xf32> -> vector<12x128xf32>
    %188 = vector.extract_strided_slice %187 {offsets = [0, 0], sizes = [8, 128], strides = [1, 1]} : vector<12x128xf32> to vector<8x128xf32>
    %189 = arith.mulf %188, %36 : vector<8x128xf32>
    %190 = arith.mulf %189, %87 : vector<8x128xf32>
    %191 = vector.extract_strided_slice %187 {offsets = [8, 0], sizes = [4, 128], strides = [1, 1]} : vector<12x128xf32> to vector<4x128xf32>
    %192 = vector.extract_strided_slice %1 {offsets = [0, 63], sizes = [4, 8], strides = [1, 1]} : vector<32x128xf32> to vector<4x8xf32>
    %cst_49 = arith.constant dense<0.000000e+00> : vector<4x128xf32>
    %193 = tpu.matmul %192, %190, %cst_49 {dimension_numbers = #tpu.dot_dimension_numbers<[1], [0], [0], [1], [0, 0, 1, 1], [], []>} : vector<4x8xf32>, vector<8x128xf32>, vector<4x128xf32> -> vector<4x128xf32>
    %194 = vector.broadcast %182 : vector<4x1xf32> to vector<4x128xf32>
    %195 = arith.mulf %66, %194 : vector<4x128xf32>
    %196 = arith.mulf %49, %191 : vector<4x128xf32>
    %197 = arith.addf %195, %196 : vector<4x128xf32>
    %198 = arith.mulf %20, %193 : vector<4x128xf32>
    %199 = arith.addf %197, %198 : vector<4x128xf32>
    %200 = vector.broadcast %180 : vector<1x128xf32> to vector<4x128xf32>
    %201 = arith.mulf %200, %199 : vector<4x128xf32>
    %202 = arith.mulf %2, %201 : vector<4x128xf32>
    %cst_50 = arith.constant dense<0.000000e+00> : vector<128xf32>
    %203 = vector.multi_reduction <add>, %202, %cst_50 [0] : vector<4x128xf32> to vector<128xf32>
    %204 = vector.shape_cast %203 : vector<128xf32> to vector<1x128xf32>
    %205 = arith.subf %179, %178 : vector<1x128xf32>
    %206 = arith.subf %205, %204 : vector<1x128xf32>
    %c0_51 = arith.constant 0 : index
    %c0_52 = arith.constant 0 : index
    %207 = vector.load %arg3[%c0_51, %c0_52] : memref<1x128xf32, #tpu.memory_space<vmem>>, vector<1x128xf32>
    tpu.vector_store %arg3[%c0_51, %c0_52], %206 {strides = array<i32>} : memref<1x128xf32, #tpu.memory_space<vmem>>, vector<1x128xf32>,
    return
  }
  func.func @transform_0(%arg0: i32) -> (i32, i32) {
    %c0_i32 = arith.constant 0 : i32
    %c0_i32_0 = arith.constant 0 : i32
    return %c0_i32, %arg0 : i32, i32
  }
  func.func @transform_1(%arg0: i32) -> (i32, i32) {
    %c0_i32 = arith.constant 0 : i32
    %c0_i32_0 = arith.constant 0 : i32
    %c0_i32_1 = arith.constant 0 : i32
    return %c0_i32, %c0_i32_0 : i32, i32
  }
  func.func @transform_2(%arg0: i32) -> (i32, i32) {
    %c0_i32 = arith.constant 0 : i32
    %c0_i32_0 = arith.constant 0 : i32
    return %c0_i32, %arg0 : i32, i32
  }
}

</mosaic_0001>

<llo_original>
// kernel: tpu_custom_call.1
$region0: #{tpu_custom_call.1}
  #allocation0 [shape = 'u32[]', space=smem, size = 0x4, offset = 0x4, fixed_abs, tag = 'smem constant byte address 0x4 - core index']
  #allocation1 [shape = 'u32[144,128]{1,0:T(1,128)}', space=vmem, size = 0x12000, scoped, tag = 'internal scratch']
  %s0 = inlined_call_operand.hbm [shape: f32[8,256], index: 0, kind: input, shape index: {}]
  %s1 = inlined_call_operand.hbm [shape: f32[32,128], index: 1, kind: input, shape index: {}]
  %s2 = inlined_call_operand.hbm [shape: f32[1,256], index: 2, kind: output, shape index: {}]
  %s3 = sld [smem:[#allocation0]]
  $region49: #{tpu_custom_call.1} parent=0
    _
  %s5 = ssub.s32 1, %s3
  %s6 = scalar_select 0, %s5, %s3
  $region1: #{tpu_custom_call.1} parent=0
    #allocation2 [shape = 'u8[8192]{0}', space=vmem, size = 0x2000, scoped, tag = 'input window, operand 0']
    #allocation3 [shape = 's32[2]{0}', space=sflag, size = 0x8, scoped, tag = 'scoped memory for tpu_custom_call.1']
    #allocation4 [shape = 's32[2]{0}', space=sflag, size = 0x8, scoped, tag = 'scoped memory for tpu_custom_call.1']
    #allocation5 [shape = 'u8[16384]{0}', space=vmem, size = 0x4000, scoped, tag = 'input window, operand 1, single buffered']
    #allocation6 [shape = 's32[1]{0}', space=sflag, size = 0x4, scoped, tag = 'scoped memory for tpu_custom_call.1']
    #allocation7 [shape = 'u8[1024]{0}', space=vmem, size = 0x400, scoped, tag = 'output window, operand 0']
    %7 = vsyncpa [#allocation3], 0
    %s8 = scalar_lea.sflag [#allocation3], 1
    %9 = vsyncpa %s8, 0
    %10 = vsyncpa [#allocation6], 0
    %11 = vsyncpa [#allocation4], 0
    %s12 = scalar_lea.sflag [#allocation4], 1
    %13 = vsyncpa %s12, 0
    loop: start=0, step=1, limit=4
    $region2: #{tpu_custom_call.1} parent=1 // loop_pre_header
      _
    $region3: #{tpu_custom_call.1} parent=1 // loop_header
      %s15 = sphi 0, %s19
      %p16 = scmp.ge.s32.totalorder %s15, 4
      %s25 = sphi 0, %s27
      %s28 = sphi 0, %s25
      %s29 = sphi 0, %s28
      %s45 = sphi 0, %s29
      %s49 = sphi 0, %s49
      %s51 = sphi 0, %s49
      %s52 = sphi 0, %s51
      %s66 = sphi 0, %s52
      %s72 = sphi 0, %s74
      %s75 = sphi 0, %s72
      %s76 = sphi 0, %s75
      %s92 = sphi 0, %s76
    $region4: #{tpu_custom_call.1} parent=1 // loop_header_branch
      %18 = sbr.rel (%p16) target = $region8
    $region5: #{tpu_custom_call.1} parent=1 // loop_body
      %s20 = ssub.s32 %s15, 1
      %s21 = ssub.s32 %s15, 2
      %s22 = sadd.s32 %s15, 1
      %s23 = ssub.s32 %s15, %s22
      %p24 = scmp.eq.s32.totalorder %s23, 0
      %s26 = sadd.s32 %s25, 1
      %s27 = scalar_select %p24, %s25, %s26
      %p30 = pneg %p24
      %p31 = scmp.eq.s32.totalorder %s15, 1
      %p32 = por %p30, %p31
      %p33 = scmp.ne.s32.totalorder %s25, %s28
      %p34 = scmp.eq.s32.totalorder %s15, 0
      %p35 = por %p33, %p34
      %p36 = scmp.ne.s32.totalorder %s25, %s28
      %p37 = scmp.eq.s32.totalorder %s20, 1
      %p38 = por %p36, %p37
      %p39 = scmp.ne.s32.totalorder %s28, %s29
      %p40 = scmp.eq.s32.totalorder %s20, 0
      %p41 = por %p39, %p40
      %p42 = scmp.ne.s32.totalorder %s28, %s29
      %p43 = scmp.eq.s32.totalorder %s21, 1
      %p44 = por %p42, %p43
      %p46 = scmp.ne.s32.totalorder %s29, %s45
      %p47 = scmp.eq.s32.totalorder %s21, 0
      %p48 = por %p46, %p47
      %s50 = sadd.s32 %s49, 1
      %p53 = scmp.eq.s32.totalorder %s15, 1
      %p54 = scmp.ne.s32.totalorder %s49, %s51
      %p55 = scmp.eq.s32.totalorder %s15, 0
      %p56 = por %p54, %p55
      %p57 = scmp.ne.s32.totalorder %s49, %s51
      %p58 = scmp.eq.s32.totalorder %s20, 1
      %p59 = por %p57, %p58
      %p60 = scmp.ne.s32.totalorder %s51, %s52
      %p61 = scmp.eq.s32.totalorder %s20, 0
      %p62 = por %p60, %p61
      %p63 = scmp.ne.s32.totalorder %s51, %s52
      %p64 = scmp.eq.s32.totalorder %s21, 1
      %p65 = por %p63, %p64
      %p67 = scmp.ne.s32.totalorder %s52, %s66
      %p68 = scmp.eq.s32.totalorder %s21, 0
      %p69 = por %p67, %p68
      %s70 = ssub.s32 %s15, %s22
      %p71 = scmp.eq.s32.totalorder %s70, 0
      %s73 = sadd.s32 %s72, 1
      %s74 = scalar_select %p71, %s72, %s73
      %p77 = pneg %p71
      %p78 = scmp.eq.s32.totalorder %s15, 1
      %p79 = por %p77, %p78
      %p80 = scmp.ne.s32.totalorder %s72, %s75
      %p81 = scmp.eq.s32.totalorder %s15, 0
      %p82 = por %p80, %p81
      %p83 = scmp.ne.s32.totalorder %s72, %s75
      %p84 = scmp.eq.s32.totalorder %s20, 1
      %p85 = por %p83, %p84
      %p86 = scmp.ne.s32.totalorder %s75, %s76
      %p87 = scmp.eq.s32.totalorder %s20, 0
      %p88 = por %p86, %p87
      %p89 = scmp.ne.s32.totalorder %s75, %s76
      %p90 = scmp.eq.s32.totalorder %s21, 1
      %p91 = por %p89, %p90
      %p93 = scmp.ne.s32.totalorder %s76, %s92
      %p94 = scmp.eq.s32.totalorder %s21, 0
      %p95 = por %p93, %p94
      %p96 = scmp.le.s32.totalorder 1, %s15
      %p97 = scmp.lt.s32.totalorder %s15, 3
      %p98 = pnand %p96, %p97
      %p99 = pneg %p98
      // Predicated region
      $region9: #{tpu_custom_call.1} parent=5 // pred_check
        _
      $region10: #{tpu_custom_call.1} parent=5 // pred_check_branch
        %101 = sbr.rel (%p98) target = $region12
      $region11: #{tpu_custom_call.1} parent=5 // pred_region
        %s102 = ssub.s32 %s15, 1
        // Predicated region
        $region13: #{tpu_custom_call.1} parent=11 // pred_check
          %p103 = pneg %p62
        $region14: #{tpu_custom_call.1} parent=11 // pred_check_branch
          %105 = sbr.rel (%p103) target = $region16
        $region15: #{tpu_custom_call.1} parent=11 // pred_region
          %s107 = ssub.s32 512, 512
          %108 = vsyncadd [#allocation6], %s107
          %s109 = sshll.u32 [#allocation5], 4
          %s110 = int_to_ptr.vmem [resolvable:$true] %s109
          %115 = dma.hbm_to_vmem [thread:$0]  %s1, 512, %s110, [#allocation6], 128, 128, 8
        $region16: #{tpu_custom_call.1} parent=11 // pred_fallthru
          _
      $region12: #{tpu_custom_call.1} parent=5 // pred_fallthru
        _
      %p116 = scmp.lt.s32.totalorder %s15, 2
      // Predicated region
      $region17: #{tpu_custom_call.1} parent=5 // pred_check
        %p117 = pneg %p116
      $region18: #{tpu_custom_call.1} parent=5 // pred_check_branch
        %119 = sbr.rel (%p117) target = $region20
      $region19: #{tpu_custom_call.1} parent=5 // pred_region
        // Predicated region
        $region21: #{tpu_custom_call.1} parent=19 // pred_check
          %p120 = pneg %p35
        $region22: #{tpu_custom_call.1} parent=19 // pred_check_branch
          %122 = sbr.rel (%p120) target = $region24
        $region23: #{tpu_custom_call.1} parent=19 // pred_region
          %s123 = sand.u32 %s25, 1
          %s124 = scalar_lea.sflag [#allocation3], %s123
          %s125 = sand.u32 %s25, 1
          %s126 = smul.addr %s125, 8
          %s127 = scalar_lea.vmem [#allocation2], %s126
          %s129 = ssub.s32 128, 128
          %130 = vsyncadd %s124, %s129
          %s131 = smul.addr %s15, 128
          %s132 = scalar_lea.hbm %s0, %s131
          %s134 = sshll.u32 %s127, 4
          %s135 = int_to_ptr.vmem [resolvable:$true] %s134
          %137 = dma.hbm_to_vmem [thread:$0]  %s132, 128, %s135, %s124
        $region24: #{tpu_custom_call.1} parent=19 // pred_fallthru
          _
      $region20: #{tpu_custom_call.1} parent=5 // pred_fallthru
        _
      %p138 = scmp.le.s32.totalorder 1, %s15
      %p139 = scmp.lt.s32.totalorder %s15, 3
      %p140 = pnand %p138, %p139
      %p141 = pneg %p140
      // Predicated region
      $region25: #{tpu_custom_call.1} parent=5 // pred_check
        _
      $region26: #{tpu_custom_call.1} parent=5 // pred_check_branch
        %143 = sbr.rel (%p140) target = $region28
      $region27: #{tpu_custom_call.1} parent=5 // pred_region
        %s144 = ssub.s32 %s15, 1
        %s145 = sand.u32 %s28, 1
        %s146 = scalar_lea.sflag [#allocation3], %s145
        %s147 = sand.u32 %s28, 1
        %s148 = smul.addr %s147, 8
        %s149 = scalar_lea.vmem [#allocation2], %s148
        // Predicated region
        $region29: #{tpu_custom_call.1} parent=27 // pred_check
          %p150 = pneg %p41
        $region30: #{tpu_custom_call.1} parent=27 // pred_check_branch
          %152 = sbr.rel (%p150) target = $region32
        $region31: #{tpu_custom_call.1} parent=27 // pred_region
          %153 = dma.done %s146, 128
        $region32: #{tpu_custom_call.1} parent=27 // pred_fallthru
          _
        // Predicated region
        $region33: #{tpu_custom_call.1} parent=27 // pred_check
          %p154 = pneg %p62
        $region34: #{tpu_custom_call.1} parent=27 // pred_check_branch
          %156 = sbr.rel (%p154) target = $region36
        $region35: #{tpu_custom_call.1} parent=27 // pred_region
          %157 = dma.done [#allocation6], 512
        $region36: #{tpu_custom_call.1} parent=27 // pred_fallthru
          _
        %s158 = sand.u32 %s28, 1
        %s159 = scalar_lea.sflag [#allocation3], %s158
        %s160 = sand.u32 %s28, 1
        %s161 = smul.addr %s160, 8
        %s162 = scalar_lea.vmem [#allocation2], %s161
        %p163 = pneg %p41
        %p164 = pneg %p38
        %p165 = pneg %p62
        %p166 = pneg %p59
        %p167 = pneg %p88
        %p168 = pneg %p85
        %s169 = sand.u32 %s75, 1
        %s170 = scalar_lea.sflag [#allocation4], %s169
        %s171 = sand.u32 %s75, 1
        %s172 = scalar_lea.vmem [#allocation7], %s171
        %v173 = vld [vmem:[%s149] sm:$0xff]
        %v174 = vld [vmem:[#allocation5] sm:$0xff]
        %v175 = vld [vmem:[#allocation5 + $0x8] sm:$0xff]
        %v176 = vld [vmem:[#allocation5 + $0x10] sm:$0xff]
        %v177 = vld [vmem:[#allocation5 + $0x18] sm:$0xff]
        %179 = vset.pattern.permute.xlu0 8
        %180 = vperm.xlu0 %179, %v174
        %v181 = vpop.permute.xlu0 %180
        %184 = vset.pattern.permute.xlu0 8
        %185 = vperm.xlu0 %184, %v175
        %v186 = vpop.permute.xlu0 %185
        %189 = vset.pattern.permute.xlu0 8
        %190 = vperm.xlu0 %189, %v176
        %v191 = vpop.permute.xlu0 %190
        %vm193 = vcmask 64512
        %v194 = vsel %vm193, %v174, 0
        %v196 = vsel %vm193, %v175, 0
        %v198 = vsel %vm193, %v176, 0
        %200 = vmatprep.subr.mxu0 0.0
        %201 = vmatpush1.msra.mxu0 0.0
        %202 = vmatprep.subr.mxu0 0.0
        %203 = vmatpush1.msra.mxu0 0.0
        %204 = vmatprep.subr.mxu0 0.0
        %205 = vmatpush1.msra.mxu0 0.0
        %206 = vmatprep.subr.mxu0 0.0
        %207 = vmatpush1.msra.mxu0 0.0
        %208 = vmatprep.subr.mxu0 0.0
        %209 = vmatpush1.msra.mxu0 0.0
        %210 = vmatprep.subr.mxu0 0.0
        %211 = vmatpush1.msra.mxu0 0.0
        %212 = vmatprep.subr.mxu0 0.0
        %213 = vmatpush1.msra.mxu0 0.0
        %214 = vmatprep.subr.mxu0 0.0
        %215 = vmatpush1.msra.mxu0 0.0
        %216 = vmatprep.subr.mxu0 0.0
        %217 = vmatpush1.msra.mxu0 0.0
        %218 = vmatprep.subr.mxu0 0.0
        %219 = vmatpush1.msra.mxu0 0.0
        %220 = vmatprep.subr.mxu0 0.0
        %221 = vmatpush1.msra.mxu0 0.0
        %222 = vmatprep.subr.mxu0 0.0
        %223 = vmatpush1.msra.mxu0 0.0
        %224 = vmatprep.subr.mxu0 0.0
        %225 = vmatpush1.msra.mxu0 0.0
        %226 = vmatprep.subr.mxu0 0.0
        %227 = vmatpush1.msra.mxu0 0.0
        %228 = vmatprep.subr.mxu0 0.0
        %229 = vmatpush1.msra.mxu0 0.0
        %230 = vmatprep.subr.mxu0 0.0
        %231 = vmatpush1.msra.mxu0 %v173
        %232 = vmatprep.subr.mxu0 0.0
        %233 = vmatpush2.msra.mxu0 0.0
        %234 = vmatprep.subr.mxu0 0.0
        %235 = vmatpush2.msra.mxu0 0.0
        %236 = vmatprep.subr.mxu0 0.0
        %237 = vmatpush2.msra.mxu0 0.0
        %238 = vmatprep.subr.mxu0 0.0
        %239 = vmatpush2.msra.mxu0 0.0
        %240 = vmatprep.subr.mxu0 0.0
        %241 = vmatpush2.msra.mxu0 0.0
        %242 = vmatprep.subr.mxu0 0.0
        %243 = vmatpush2.msra.mxu0 0.0
        %244 = vmatprep.subr.mxu0 0.0
        %245 = vmatpush2.msra.mxu0 0.0
        %246 = vmatprep.subr.mxu0 0.0
        %247 = vmatpush2.msra.mxu0 0.0
        %248 = vmatprep.subr.mxu0 0.0
        %249 = vmatpush2.msra.mxu0 0.0
        %250 = vmatprep.subr.mxu0 0.0
        %251 = vmatpush2.msra.mxu0 0.0
        %252 = vmatprep.subr.mxu0 0.0
        %253 = vmatpush2.msra.mxu0 0.0
        %254 = vmatprep.subr.mxu0 0.0
        %255 = vmatpush2.msra.mxu0 0.0
        %256 = vmatprep.subr.mxu0 0.0
        %257 = vmatpush2.msra.mxu0 0.0
        %258 = vmatprep.subr.mxu0 0.0
        %259 = vmatpush2.msra.mxu0 0.0
        %260 = vmatprep.subr.mxu0 0.0
        %261 = vmatpush2.msra.mxu0 0.0
        %262 = vmatprep.subr.mxu0 0.0
        %263 = vmatpush2.msra.mxu0 0.0
        %264 = vmatprep.mubr.f32.mxu0 0.0
        %265 = vmatmul.mubr.f32.gmra.mxu0 %v194
        %v266 = vpop.f32.mrf.mxu0
        %v267 = vadd.f32 %v181, %v266
        %v268 = vpop.f32.mrf.mxu0
        %269 = vmatprep.mubr.f32.mxu0 0.0
        %270 = vmatmul.mubr.f32.gmra.mxu0 %v196
        %v271 = vpop.f32.mrf.mxu0
        %v272 = vadd.f32 %v186, %v271
        %v273 = vpop.f32.mrf.mxu0
        %274 = vmatprep.mubr.f32.mxu0 0.0
        %275 = vmatmul.mubr.f32.gmra.mxu0 %v198
        %v276 = vpop.f32.mrf.mxu0
        %v277 = vadd.f32 %v191, %v276
        %v278 = vpop.f32.mrf.mxu0
        %279 = vdwg.mxu0
        %v280 = vand.u32 2147483647, %v272
        %v281 = vsub.f32 0.0, %v280
        %v282 = vmul.f32 %v281, 1.442695
        %v283 = vpow.pop %v282
        %v284 = vmax.f32 %v272, 0.0
        %v285 = vadd.f32 %v283, 1.0
        %v286 = vlog2.pop %v285
        %v287 = vmul.f32 %v286, 0.6931472
        %v288 = vadd.f32 %v284, %v287
        %289 = vset.pattern.permute.xlu0 17
        %290 = vperm.xlu0 %289, %v174
        %v291 = vpop.permute.xlu0 %290
        %293 = vset.pattern.permute.xlu0 17
        %294 = vperm.xlu0 %293, %v175
        %v295 = vpop.permute.xlu0 %294
        %297 = vset.pattern.permute.xlu0 17
        %298 = vperm.xlu0 %297, %v176
        %v299 = vpop.permute.xlu0 %298
        %302 = vset.pattern.permute.xlu0 17
        %303 = vperm.xlu0 %302, %v177
        %v304 = vpop.permute.xlu0 %303
        %306 = vrot.lane.b32.xlu0 %v174, 119
        %v307 = vpop.permute.xlu0 %306
        %308 = vrot.lane.b32.xlu0 %v175, 119
        %v309 = vpop.permute.xlu0 %308
        %310 = vrot.lane.b32.xlu0 %v176, 119
        %v311 = vpop.permute.xlu0 %310
        %312 = vrot.lane.b32.xlu0 %v177, 119
        %v313 = vpop.permute.xlu0 %312
        %v314 = vsel %vm193, %v307, 0
        %v316 = vsel %vm193, %v309, 0
        %v318 = vsel %vm193, %v311, 0
        %v320 = vsel %vm193, %v313, 0
        %322 = vmatprep.subr.mxu0 0.0
        %323 = vmatpush1.msra.mxu0 0.0
        %324 = vmatprep.subr.mxu0 0.0
        %325 = vmatpush1.msra.mxu0 0.0
        %326 = vmatprep.subr.mxu0 0.0
        %327 = vmatpush1.msra.mxu0 0.0
        %328 = vmatprep.subr.mxu0 0.0
        %329 = vmatpush1.msra.mxu0 0.0
        %330 = vmatprep.subr.mxu0 0.0
        %331 = vmatpush1.msra.mxu0 0.0
        %332 = vmatprep.subr.mxu0 0.0
        %333 = vmatpush1.msra.mxu0 0.0
        %334 = vmatprep.subr.mxu0 0.0
        %335 = vmatpush1.msra.mxu0 0.0
        %336 = vmatprep.subr.mxu0 0.0
        %337 = vmatpush1.msra.mxu0 0.0
        %338 = vmatprep.subr.mxu0 0.0
        %339 = vmatpush1.msra.mxu0 0.0
        %340 = vmatprep.subr.mxu0 0.0
        %341 = vmatpush1.msra.mxu0 0.0
        %342 = vmatprep.subr.mxu0 0.0
        %343 = vmatpush1.msra.mxu0 0.0
        %344 = vmatprep.subr.mxu0 0.0
        %345 = vmatpush1.msra.mxu0 0.0
        %346 = vmatprep.subr.mxu0 0.0
        %347 = vmatpush1.msra.mxu0 0.0
        %348 = vmatprep.subr.mxu0 0.0
        %349 = vmatpush1.msra.mxu0 0.0
        %350 = vmatprep.subr.mxu0 0.0
        %351 = vmatpush1.msra.mxu0 0.0
        %352 = vmatprep.subr.mxu0 0.0
        %353 = vmatpush1.msra.mxu0 %v288
        %354 = vmatprep.subr.mxu0 0.0
        %355 = vmatpush2.msra.mxu0 0.0
        %356 = vmatprep.subr.mxu0 0.0
        %357 = vmatpush2.msra.mxu0 0.0
        %358 = vmatprep.subr.mxu0 0.0
        %359 = vmatpush2.msra.mxu0 0.0
        %360 = vmatprep.subr.mxu0 0.0
        %361 = vmatpush2.msra.mxu0 0.0
        %362 = vmatprep.subr.mxu0 0.0
        %363 = vmatpush2.msra.mxu0 0.0
        %364 = vmatprep.subr.mxu0 0.0
        %365 = vmatpush2.msra.mxu0 0.0
        %366 = vmatprep.subr.mxu0 0.0
        %367 = vmatpush2.msra.mxu0 0.0
        %368 = vmatprep.subr.mxu0 0.0
        %369 = vmatpush2.msra.mxu0 0.0
        %370 = vmatprep.subr.mxu0 0.0
        %371 = vmatpush2.msra.mxu0 0.0
        %372 = vmatprep.subr.mxu0 0.0
        %373 = vmatpush2.msra.mxu0 0.0
        %374 = vmatprep.subr.mxu0 0.0
        %375 = vmatpush2.msra.mxu0 0.0
        %376 = vmatprep.subr.mxu0 0.0
        %377 = vmatpush2.msra.mxu0 0.0
        %378 = vmatprep.subr.mxu0 0.0
        %379 = vmatpush2.msra.mxu0 0.0
        %380 = vmatprep.subr.mxu0 0.0
        %381 = vmatpush2.msra.mxu0 0.0
        %382 = vmatprep.subr.mxu0 0.0
        %383 = vmatpush2.msra.mxu0 0.0
        %384 = vmatprep.subr.mxu0 0.0
        %385 = vmatpush2.msra.mxu0 0.0
        %386 = vmatprep.mubr.f32.mxu0 0.0
        %387 = vmatmul.mubr.f32.gmra.mxu0 %v314
        %v388 = vpop.f32.mrf.mxu0
        %v389 = vadd.f32 %v291, %v388
        %v390 = vpop.f32.mrf.mxu0
        %391 = vmatprep.mubr.f32.mxu0 0.0
        %392 = vmatmul.mubr.f32.gmra.mxu0 %v316
        %v393 = vpop.f32.mrf.mxu0
        %v394 = vadd.f32 %v295, %v393
        %v395 = vpop.f32.mrf.mxu0
        %396 = vmatprep.mubr.f32.mxu0 0.0
        %397 = vmatmul.mubr.f32.gmra.mxu0 %v318
        %v398 = vpop.f32.mrf.mxu0
        %v399 = vadd.f32 %v299, %v398
        %v400 = vpop.f32.mrf.mxu0
        %401 = vmatprep.mubr.f32.mxu0 0.0
        %402 = vmatmul.mubr.f32.gmra.mxu0 %v320
        %v403 = vpop.f32.mrf.mxu0
        %v404 = vadd.f32 %v304, %v403
        %v405 = vpop.f32.mrf.mxu0
        %406 = vdwg.mxu0
        %v407 = vand.u32 2147483647, %v389
        %v408 = vsub.f32 0.0, %v407
        %v409 = vmul.f32 %v408, 1.442695
        %v410 = vpow.pop %v409
        %v411 = vmax.f32 %v389, 0.0
        %v412 = vadd.f32 %v410, 1.0
        %v413 = vlog2.pop %v412
        %v414 = vmul.f32 %v413, 0.6931472
        %v415 = vadd.f32 %v411, %v414
        %v416 = vand.u32 2147483647, %v399
        %v417 = vsub.f32 0.0, %v416
        %v418 = vmul.f32 %v417, 1.442695
        %v419 = vpow.pop %v418
        %v420 = vmax.f32 %v399, 0.0
        %v421 = vadd.f32 %v419, 1.0
        %v422 = vlog2.pop %v421
        %v423 = vmul.f32 %v422, 0.6931472
        %v424 = vadd.f32 %v420, %v423
        %425 = vset.pattern.permute.xlu0 26
        %426 = vperm.xlu0 %425, %v174
        %v427 = vpop.permute.xlu0 %426
        %429 = vset.pattern.permute.xlu0 26
        %430 = vperm.xlu0 %429, %v175
        %v431 = vpop.permute.xlu0 %430
        %433 = vrot.lane.b32.xlu0 %v174, 110
        %v434 = vpop.permute.xlu0 %433
        %435 = vrot.lane.b32.xlu0 %v175, 110
        %v436 = vpop.permute.xlu0 %435
        %v437 = vsel %vm193, %v434, 0
        %v439 = vsel %vm193, %v436, 0
        %441 = vmatprep.subr.mxu0 0.0
        %442 = vmatpush1.msra.mxu0 0.0
        %443 = vmatprep.subr.mxu0 0.0
        %444 = vmatpush1.msra.mxu0 0.0
        %445 = vmatprep.subr.mxu0 0.0
        %446 = vmatpush1.msra.mxu0 0.0
        %447 = vmatprep.subr.mxu0 0.0
        %448 = vmatpush1.msra.mxu0 0.0
        %449 = vmatprep.subr.mxu0 0.0
        %450 = vmatpush1.msra.mxu0 0.0
        %451 = vmatprep.subr.mxu0 0.0
        %452 = vmatpush1.msra.mxu0 0.0
        %453 = vmatprep.subr.mxu0 0.0
        %454 = vmatpush1.msra.mxu0 0.0
        %455 = vmatprep.subr.mxu0 0.0
        %456 = vmatpush1.msra.mxu0 0.0
        %457 = vmatprep.subr.mxu0 0.0
        %458 = vmatpush1.msra.mxu0 0.0
        %459 = vmatprep.subr.mxu0 0.0
        %460 = vmatpush1.msra.mxu0 0.0
        %461 = vmatprep.subr.mxu0 0.0
        %462 = vmatpush1.msra.mxu0 0.0
        %463 = vmatprep.subr.mxu0 0.0
        %464 = vmatpush1.msra.mxu0 0.0
        %465 = vmatprep.subr.mxu0 0.0
        %466 = vmatpush1.msra.mxu0 0.0
        %467 = vmatprep.subr.mxu0 0.0
        %468 = vmatpush1.msra.mxu0 0.0
        %469 = vmatprep.subr.mxu0 0.0
        %470 = vmatpush1.msra.mxu0 0.0
        %471 = vmatprep.subr.mxu0 0.0
        %472 = vmatpush1.msra.mxu0 %v424
        %473 = vmatprep.subr.mxu0 0.0
        %474 = vmatpush2.msra.mxu0 0.0
        %475 = vmatprep.subr.mxu0 0.0
        %476 = vmatpush2.msra.mxu0 0.0
        %477 = vmatprep.subr.mxu0 0.0
        %478 = vmatpush2.msra.mxu0 0.0
        %479 = vmatprep.subr.mxu0 0.0
        %480 = vmatpush2.msra.mxu0 0.0
        %481 = vmatprep.subr.mxu0 0.0
        %482 = vmatpush2.msra.mxu0 0.0
        %483 = vmatprep.subr.mxu0 0.0
        %484 = vmatpush2.msra.mxu0 0.0
        %485 = vmatprep.subr.mxu0 0.0
        %486 = vmatpush2.msra.mxu0 0.0
        %487 = vmatprep.subr.mxu0 0.0
        %488 = vmatpush2.msra.mxu0 0.0
        %489 = vmatprep.subr.mxu0 0.0
        %490 = vmatpush2.msra.mxu0 0.0
        %491 = vmatprep.subr.mxu0 0.0
        %492 = vmatpush2.msra.mxu0 0.0
        %493 = vmatprep.subr.mxu0 0.0
        %494 = vmatpush2.msra.mxu0 0.0
        %495 = vmatprep.subr.mxu0 0.0
        %496 = vmatpush2.msra.mxu0 0.0
        %497 = vmatprep.subr.mxu0 0.0
        %498 = vmatpush2.msra.mxu0 0.0
        %499 = vmatprep.subr.mxu0 0.0
        %500 = vmatpush2.msra.mxu0 0.0
        %501 = vmatprep.subr.mxu0 0.0
        %502 = vmatpush2.msra.mxu0 0.0
        %503 = vmatprep.subr.mxu0 0.0
        %504 = vmatpush2.msra.mxu0 0.0
        %505 = vmatprep.mubr.f32.mxu0 0.0
        %506 = vmatmul.mubr.f32.gmra.mxu0 %v437
        %v507 = vpop.f32.mrf.mxu0
        %v508 = vadd.f32 %v427, %v507
        %v509 = vpop.f32.mrf.mxu0
        %510 = vmatprep.mubr.f32.mxu0 0.0
        %511 = vmatmul.mubr.f32.gmra.mxu0 %v439
        %v512 = vpop.f32.mrf.mxu0
        %v513 = vadd.f32 %v431, %v512
        %v514 = vpop.f32.mrf.mxu0
        %515 = vdwg.mxu0
        %v516 = vand.u32 2147483647, %v508
        %v517 = vsub.f32 0.0, %v516
        %v518 = vmul.f32 %v517, 1.442695
        %v519 = vpow.pop %v518
        %v520 = vmax.f32 %v508, 0.0
        %v521 = vadd.f32 %v519, 1.0
        %v522 = vlog2.pop %v521
        %v523 = vmul.f32 %v522, 0.6931472
        %v524 = vadd.f32 %v520, %v523
        %v525 = vand.u32 2147483647, %v267
        %v526 = vsub.f32 0.0, %v525
        %v527 = vmul.f32 %v526, 1.442695
        %v528 = vpow.pop %v527
        %v529 = vadd.f32 %v528, 1.0
        %v530 = vrcp.pop %v529
        %v531 = vmul.f32 1.0, %v530
        %v532 = vmax.f32 %v267, 0.0
        %v533 = vlog2.pop %v529
        %v534 = vmul.f32 %v533, 0.6931472
        %v535 = vadd.f32 %v532, %v534
        %vm536 = vcmp.ge.f32.partialorder %v267, 0.0
        %v537 = vmul.f32 %v528, %v531
        %v538 = vsel %vm536, %v531, %v537
        %v539 = vmul.f32 %v535, %v415
        %540 = vrot.lane.b32.xlu0 %v174, 93
        %v541 = vpop.permute.xlu0 %540
        %v542 = vsel %vm193, %v541, 0
        %544 = vmatprep.subr.mxu0 0.0
        %545 = vmatpush1.msra.mxu0 0.0
        %546 = vmatprep.subr.mxu0 0.0
        %547 = vmatpush1.msra.mxu0 0.0
        %548 = vmatprep.subr.mxu0 0.0
        %549 = vmatpush1.msra.mxu0 0.0
        %550 = vmatprep.subr.mxu0 0.0
        %551 = vmatpush1.msra.mxu0 0.0
        %552 = vmatprep.subr.mxu0 0.0
        %553 = vmatpush1.msra.mxu0 0.0
        %554 = vmatprep.subr.mxu0 0.0
        %555 = vmatpush1.msra.mxu0 0.0
        %556 = vmatprep.subr.mxu0 0.0
        %557 = vmatpush1.msra.mxu0 0.0
        %558 = vmatprep.subr.mxu0 0.0
        %559 = vmatpush1.msra.mxu0 0.0
        %560 = vmatprep.subr.mxu0 0.0
        %561 = vmatpush1.msra.mxu0 0.0
        %562 = vmatprep.subr.mxu0 0.0
        %563 = vmatpush1.msra.mxu0 0.0
        %564 = vmatprep.subr.mxu0 0.0
        %565 = vmatpush1.msra.mxu0 0.0
        %566 = vmatprep.subr.mxu0 0.0
        %567 = vmatpush1.msra.mxu0 0.0
        %568 = vmatprep.subr.mxu0 0.0
        %569 = vmatpush1.msra.mxu0 0.0
        %570 = vmatprep.subr.mxu0 0.0
        %571 = vmatpush1.msra.mxu0 0.0
        %572 = vmatprep.subr.mxu0 0.0
        %573 = vmatpush1.msra.mxu0 0.0
        %574 = vmatprep.subr.mxu0 0.0
        %575 = vmatpush1.msra.mxu0 %v539
        %576 = vmatprep.subr.mxu0 0.0
        %577 = vmatpush2.msra.mxu0 0.0
        %578 = vmatprep.subr.mxu0 0.0
        %579 = vmatpush2.msra.mxu0 0.0
        %580 = vmatprep.subr.mxu0 0.0
        %581 = vmatpush2.msra.mxu0 0.0
        %582 = vmatprep.subr.mxu0 0.0
        %583 = vmatpush2.msra.mxu0 0.0
        %584 = vmatprep.subr.mxu0 0.0
        %585 = vmatpush2.msra.mxu0 0.0
        %586 = vmatprep.subr.mxu0 0.0
        %587 = vmatpush2.msra.mxu0 0.0
        %588 = vmatprep.subr.mxu0 0.0
        %589 = vmatpush2.msra.mxu0 0.0
        %590 = vmatprep.subr.mxu0 0.0
        %591 = vmatpush2.msra.mxu0 0.0
        %592 = vmatprep.subr.mxu0 0.0
        %593 = vmatpush2.msra.mxu0 0.0
        %594 = vmatprep.subr.mxu0 0.0
        %595 = vmatpush2.msra.mxu0 0.0
        %596 = vmatprep.subr.mxu0 0.0
        %597 = vmatpush2.msra.mxu0 0.0
        %598 = vmatprep.subr.mxu0 0.0
        %599 = vmatpush2.msra.mxu0 0.0
        %600 = vmatprep.subr.mxu0 0.0
        %601 = vmatpush2.msra.mxu0 0.0
        %602 = vmatprep.subr.mxu0 0.0
        %603 = vmatpush2.msra.mxu0 0.0
        %604 = vmatprep.subr.mxu0 0.0
        %605 = vmatpush2.msra.mxu0 0.0
        %606 = vmatprep.subr.mxu0 0.0
        %607 = vmatpush2.msra.mxu0 0.0
        %608 = vmatprep.mubr.f32.mxu0 0.0
        %609 = vmatmul.mubr.f32.gmra.mxu0 %v542
        %v610 = vpop.f32.mrf.mxu0
        %v611 = vadd.f32 0.0, %v610
        %v612 = vpop.f32.mrf.mxu0
        %613 = vdwg.mxu0
        %v614 = vadd.f32 %v394, %v611
        %v615 = vand.u32 2147483647, %v614
        %v616 = vsub.f32 0.0, %v615
        %v617 = vmul.f32 %v616, 1.442695
        %v618 = vpow.pop %v617
        %v619 = vadd.f32 %v618, 1.0
        %v620 = vrcp.pop %v619
        %v621 = vmul.f32 1.0, %v620
        %v622 = vmax.f32 %v614, 0.0
        %v623 = vlog2.pop %v619
        %v624 = vmul.f32 %v623, 0.6931472
        %v625 = vadd.f32 %v622, %v624
        %vm626 = vcmp.ge.f32.partialorder %v614, 0.0
        %v627 = vmul.f32 %v618, %v621
        %v628 = vsel %vm626, %v621, %v627
        %v629 = vmul.f32 %v173, %v277
        %630 = vrot.lane.b32.xlu0 %v174, 77
        %v631 = vpop.permute.xlu0 %630
        %vm632 = vcmask 31744
        %v633 = vsel %vm632, %v631, 0
        %vm635 = vcmask 1043456
        %v637 = vsel %vm635, %v629, 0
        %639 = vmatprep.subr.mxu0 0.0
        %640 = vmatpush1.msra.mxu0 0.0
        %641 = vmatprep.subr.mxu0 0.0
        %642 = vmatpush1.msra.mxu0 0.0
        %643 = vmatprep.subr.mxu0 0.0
        %644 = vmatpush1.msra.mxu0 0.0
        %645 = vmatprep.subr.mxu0 0.0
        %646 = vmatpush1.msra.mxu0 0.0
        %647 = vmatprep.subr.mxu0 0.0
        %648 = vmatpush1.msra.mxu0 0.0
        %649 = vmatprep.subr.mxu0 0.0
        %650 = vmatpush1.msra.mxu0 0.0
        %651 = vmatprep.subr.mxu0 0.0
        %652 = vmatpush1.msra.mxu0 0.0
        %653 = vmatprep.subr.mxu0 0.0
        %654 = vmatpush1.msra.mxu0 0.0
        %655 = vmatprep.subr.mxu0 0.0
        %656 = vmatpush1.msra.mxu0 0.0
        %657 = vmatprep.subr.mxu0 0.0
        %658 = vmatpush1.msra.mxu0 0.0
        %659 = vmatprep.subr.mxu0 0.0
        %660 = vmatpush1.msra.mxu0 0.0
        %661 = vmatprep.subr.mxu0 0.0
        %662 = vmatpush1.msra.mxu0 0.0
        %663 = vmatprep.subr.mxu0 0.0
        %664 = vmatpush1.msra.mxu0 0.0
        %665 = vmatprep.subr.mxu0 0.0
        %666 = vmatpush1.msra.mxu0 0.0
        %667 = vmatprep.subr.mxu0 0.0
        %668 = vmatpush1.msra.mxu0 0.0
        %669 = vmatprep.subr.mxu0 0.0
        %670 = vmatpush1.msra.mxu0 %v637
        %671 = vmatprep.subr.mxu0 0.0
        %672 = vmatpush2.msra.mxu0 0.0
        %673 = vmatprep.subr.mxu0 0.0
        %674 = vmatpush2.msra.mxu0 0.0
        %675 = vmatprep.subr.mxu0 0.0
        %676 = vmatpush2.msra.mxu0 0.0
        %677 = vmatprep.subr.mxu0 0.0
        %678 = vmatpush2.msra.mxu0 0.0
        %679 = vmatprep.subr.mxu0 0.0
        %680 = vmatpush2.msra.mxu0 0.0
        %681 = vmatprep.subr.mxu0 0.0
        %682 = vmatpush2.msra.mxu0 0.0
        %683 = vmatprep.subr.mxu0 0.0
        %684 = vmatpush2.msra.mxu0 0.0
        %685 = vmatprep.subr.mxu0 0.0
        %686 = vmatpush2.msra.mxu0 0.0
        %687 = vmatprep.subr.mxu0 0.0
        %688 = vmatpush2.msra.mxu0 0.0
        %689 = vmatprep.subr.mxu0 0.0
        %690 = vmatpush2.msra.mxu0 0.0
        %691 = vmatprep.subr.mxu0 0.0
        %692 = vmatpush2.msra.mxu0 0.0
        %693 = vmatprep.subr.mxu0 0.0
        %694 = vmatpush2.msra.mxu0 0.0
        %695 = vmatprep.subr.mxu0 0.0
        %696 = vmatpush2.msra.mxu0 0.0
        %697 = vmatprep.subr.mxu0 0.0
        %698 = vmatpush2.msra.mxu0 0.0
        %699 = vmatprep.subr.mxu0 0.0
        %700 = vmatpush2.msra.mxu0 0.0
        %701 = vmatprep.subr.mxu0 0.0
        %702 = vmatpush2.msra.mxu0 0.0
        %703 = vmatprep.mubr.f32.mxu0 0.0
        %704 = vmatmul.mubr.f32.gmra.mxu0 %v633
        %v705 = vpop.f32.mrf.mxu0
        %v706 = vadd.f32 0.0, %v705
        %v707 = vpop.f32.mrf.mxu0
        %708 = vdwg.mxu0
        %v709 = vadd.f32 %v267, %v706
        %v710 = vand.u32 2147483647, %v709
        %v711 = vsub.f32 0.0, %v710
        %v712 = vmul.f32 %v711, 1.442695
        %v713 = vpow.pop %v712
        %v714 = vmax.f32 %v709, 0.0
        %v715 = vadd.f32 %v713, 1.0
        %v716 = vlog2.pop %v715
        %v717 = vmul.f32 %v716, 0.6931472
        %v718 = vadd.f32 %v714, %v717
        %v719 = vmul.f32 %v173, %v404
        %720 = vrot.lane.b32.xlu0 %v174, 73
        %v721 = vpop.permute.xlu0 %720
        %v722 = vsel %vm632, %v721, 0
        %v725 = vsel %vm635, %v719, 0
        %727 = vmatprep.subr.mxu0 0.0
        %728 = vmatpush1.msra.mxu0 0.0
        %729 = vmatprep.subr.mxu0 0.0
        %730 = vmatpush1.msra.mxu0 0.0
        %731 = vmatprep.subr.mxu0 0.0
        %732 = vmatpush1.msra.mxu0 0.0
        %733 = vmatprep.subr.mxu0 0.0
        %734 = vmatpush1.msra.mxu0 0.0
        %735 = vmatprep.subr.mxu0 0.0
        %736 = vmatpush1.msra.mxu0 0.0
        %737 = vmatprep.subr.mxu0 0.0
        %738 = vmatpush1.msra.mxu0 0.0
        %739 = vmatprep.subr.mxu0 0.0
        %740 = vmatpush1.msra.mxu0 0.0
        %741 = vmatprep.subr.mxu0 0.0
        %742 = vmatpush1.msra.mxu0 0.0
        %743 = vmatprep.subr.mxu0 0.0
        %744 = vmatpush1.msra.mxu0 0.0
        %745 = vmatprep.subr.mxu0 0.0
        %746 = vmatpush1.msra.mxu0 0.0
        %747 = vmatprep.subr.mxu0 0.0
        %748 = vmatpush1.msra.mxu0 0.0
        %749 = vmatprep.subr.mxu0 0.0
        %750 = vmatpush1.msra.mxu0 0.0
        %751 = vmatprep.subr.mxu0 0.0
        %752 = vmatpush1.msra.mxu0 0.0
        %753 = vmatprep.subr.mxu0 0.0
        %754 = vmatpush1.msra.mxu0 0.0
        %755 = vmatprep.subr.mxu0 0.0
        %756 = vmatpush1.msra.mxu0 0.0
        %757 = vmatprep.subr.mxu0 0.0
        %758 = vmatpush1.msra.mxu0 %v725
        %759 = vmatprep.subr.mxu0 0.0
        %760 = vmatpush2.msra.mxu0 0.0
        %761 = vmatprep.subr.mxu0 0.0
        %762 = vmatpush2.msra.mxu0 0.0
        %763 = vmatprep.subr.mxu0 0.0
        %764 = vmatpush2.msra.mxu0 0.0
        %765 = vmatprep.subr.mxu0 0.0
        %766 = vmatpush2.msra.mxu0 0.0
        %767 = vmatprep.subr.mxu0 0.0
        %768 = vmatpush2.msra.mxu0 0.0
        %769 = vmatprep.subr.mxu0 0.0
        %770 = vmatpush2.msra.mxu0 0.0
        %771 = vmatprep.subr.mxu0 0.0
        %772 = vmatpush2.msra.mxu0 0.0
        %773 = vmatprep.subr.mxu0 0.0
        %774 = vmatpush2.msra.mxu0 0.0
        %775 = vmatprep.subr.mxu0 0.0
        %776 = vmatpush2.msra.mxu0 0.0
        %777 = vmatprep.subr.mxu0 0.0
        %778 = vmatpush2.msra.mxu0 0.0
        %779 = vmatprep.subr.mxu0 0.0
        %780 = vmatpush2.msra.mxu0 0.0
        %781 = vmatprep.subr.mxu0 0.0
        %782 = vmatpush2.msra.mxu0 0.0
        %783 = vmatprep.subr.mxu0 0.0
        %784 = vmatpush2.msra.mxu0 0.0
        %785 = vmatprep.subr.mxu0 0.0
        %786 = vmatpush2.msra.mxu0 0.0
        %787 = vmatprep.subr.mxu0 0.0
        %788 = vmatpush2.msra.mxu0 0.0
        %789 = vmatprep.subr.mxu0 0.0
        %790 = vmatpush2.msra.mxu0 0.0
        %791 = vmatprep.mubr.f32.mxu0 0.0
        %792 = vmatmul.mubr.f32.gmra.mxu0 %v722
        %v793 = vpop.f32.mrf.mxu0
        %v794 = vadd.f32 0.0, %v793
        %v795 = vpop.f32.mrf.mxu0
        %796 = vdwg.mxu0
        %v797 = vmul.f32 %v718, %v415
        %798 = vmatprep.subr.mxu0 0.0
        %799 = vmatpush1.msra.mxu0 0.0
        %800 = vmatprep.subr.mxu0 0.0
        %801 = vmatpush1.msra.mxu0 0.0
        %802 = vmatprep.subr.mxu0 0.0
        %803 = vmatpush1.msra.mxu0 0.0
        %804 = vmatprep.subr.mxu0 0.0
        %805 = vmatpush1.msra.mxu0 0.0
        %806 = vmatprep.subr.mxu0 0.0
        %807 = vmatpush1.msra.mxu0 0.0
        %808 = vmatprep.subr.mxu0 0.0
        %809 = vmatpush1.msra.mxu0 0.0
        %810 = vmatprep.subr.mxu0 0.0
        %811 = vmatpush1.msra.mxu0 0.0
        %812 = vmatprep.subr.mxu0 0.0
        %813 = vmatpush1.msra.mxu0 0.0
        %814 = vmatprep.subr.mxu0 0.0
        %815 = vmatpush1.msra.mxu0 0.0
        %816 = vmatprep.subr.mxu0 0.0
        %817 = vmatpush1.msra.mxu0 0.0
        %818 = vmatprep.subr.mxu0 0.0
        %819 = vmatpush1.msra.mxu0 0.0
        %820 = vmatprep.subr.mxu0 0.0
        %821 = vmatpush1.msra.mxu0 0.0
        %822 = vmatprep.subr.mxu0 0.0
        %823 = vmatpush1.msra.mxu0 0.0
        %824 = vmatprep.subr.mxu0 0.0
        %825 = vmatpush1.msra.mxu0 0.0
        %826 = vmatprep.subr.mxu0 0.0
        %827 = vmatpush1.msra.mxu0 0.0
        %828 = vmatprep.subr.mxu0 0.0
        %829 = vmatpush1.msra.mxu0 %v797
        %830 = vmatprep.subr.mxu0 0.0
        %831 = vmatpush2.msra.mxu0 0.0
        %832 = vmatprep.subr.mxu0 0.0
        %833 = vmatpush2.msra.mxu0 0.0
        %834 = vmatprep.subr.mxu0 0.0
        %835 = vmatpush2.msra.mxu0 0.0
        %836 = vmatprep.subr.mxu0 0.0
        %837 = vmatpush2.msra.mxu0 0.0
        %838 = vmatprep.subr.mxu0 0.0
        %839 = vmatpush2.msra.mxu0 0.0
        %840 = vmatprep.subr.mxu0 0.0
        %841 = vmatpush2.msra.mxu0 0.0
        %842 = vmatprep.subr.mxu0 0.0
        %843 = vmatpush2.msra.mxu0 0.0
        %844 = vmatprep.subr.mxu0 0.0
        %845 = vmatpush2.msra.mxu0 0.0
        %846 = vmatprep.subr.mxu0 0.0
        %847 = vmatpush2.msra.mxu0 0.0
        %848 = vmatprep.subr.mxu0 0.0
        %849 = vmatpush2.msra.mxu0 0.0
        %850 = vmatprep.subr.mxu0 0.0
        %851 = vmatpush2.msra.mxu0 0.0
        %852 = vmatprep.subr.mxu0 0.0
        %853 = vmatpush2.msra.mxu0 0.0
        %854 = vmatprep.subr.mxu0 0.0
        %855 = vmatpush2.msra.mxu0 0.0
        %856 = vmatprep.subr.mxu0 0.0
        %857 = vmatpush2.msra.mxu0 0.0
        %858 = vmatprep.subr.mxu0 0.0
        %859 = vmatpush2.msra.mxu0 0.0
        %860 = vmatprep.subr.mxu0 0.0
        %861 = vmatpush2.msra.mxu0 0.0
        %862 = vmatprep.mubr.f32.mxu0 0.0
        %863 = vmatmul.mubr.f32.gmra.mxu0 %v542
        %v864 = vpop.f32.mrf.mxu0
        %v865 = vadd.f32 0.0, %v864
        %v866 = vpop.f32.mrf.mxu0
        %867 = vdwg.mxu0
        %v868 = vadd.f32 %v394, %v865
        %v869 = vadd.f32 %v868, %v794
        %v870 = vand.u32 2147483647, %v869
        %v871 = vsub.f32 0.0, %v870
        %v872 = vmul.f32 %v871, 1.442695
        %v873 = vpow.pop %v872
        %v874 = vmax.f32 %v869, 0.0
        %v875 = vadd.f32 %v873, 1.0
        %v876 = vlog2.pop %v875
        %v877 = vmul.f32 %v876, 0.6931472
        %v878 = vadd.f32 %v874, %v877
        %v879 = vmul.f32 %v173, %v513
        %880 = vrot.lane.b32.xlu0 %v174, 69
        %v881 = vpop.permute.xlu0 %880
        %v882 = vsel %vm632, %v881, 0
        %v885 = vsel %vm635, %v879, 0
        %887 = vmatprep.subr.mxu0 0.0
        %888 = vmatpush1.msra.mxu0 0.0
        %889 = vmatprep.subr.mxu0 0.0
        %890 = vmatpush1.msra.mxu0 0.0
        %891 = vmatprep.subr.mxu0 0.0
        %892 = vmatpush1.msra.mxu0 0.0
        %893 = vmatprep.subr.mxu0 0.0
        %894 = vmatpush1.msra.mxu0 0.0
        %895 = vmatprep.subr.mxu0 0.0
        %896 = vmatpush1.msra.mxu0 0.0
        %897 = vmatprep.subr.mxu0 0.0
        %898 = vmatpush1.msra.mxu0 0.0
        %899 = vmatprep.subr.mxu0 0.0
        %900 = vmatpush1.msra.mxu0 0.0
        %901 = vmatprep.subr.mxu0 0.0
        %902 = vmatpush1.msra.mxu0 0.0
        %903 = vmatprep.subr.mxu0 0.0
        %904 = vmatpush1.msra.mxu0 0.0
        %905 = vmatprep.subr.mxu0 0.0
        %906 = vmatpush1.msra.mxu0 0.0
        %907 = vmatprep.subr.mxu0 0.0
        %908 = vmatpush1.msra.mxu0 0.0
        %909 = vmatprep.subr.mxu0 0.0
        %910 = vmatpush1.msra.mxu0 0.0
        %911 = vmatprep.subr.mxu0 0.0
        %912 = vmatpush1.msra.mxu0 0.0
        %913 = vmatprep.subr.mxu0 0.0
        %914 = vmatpush1.msra.mxu0 0.0
        %915 = vmatprep.subr.mxu0 0.0
        %916 = vmatpush1.msra.mxu0 0.0
        %917 = vmatprep.subr.mxu0 0.0
        %918 = vmatpush1.msra.mxu0 %v885
        %919 = vmatprep.subr.mxu0 0.0
        %920 = vmatpush2.msra.mxu0 0.0
        %921 = vmatprep.subr.mxu0 0.0
        %922 = vmatpush2.msra.mxu0 0.0
        %923 = vmatprep.subr.mxu0 0.0
        %924 = vmatpush2.msra.mxu0 0.0
        %925 = vmatprep.subr.mxu0 0.0
        %926 = vmatpush2.msra.mxu0 0.0
        %927 = vmatprep.subr.mxu0 0.0
        %928 = vmatpush2.msra.mxu0 0.0
        %929 = vmatprep.subr.mxu0 0.0
        %930 = vmatpush2.msra.mxu0 0.0
        %931 = vmatprep.subr.mxu0 0.0
        %932 = vmatpush2.msra.mxu0 0.0
        %933 = vmatprep.subr.mxu0 0.0
        %934 = vmatpush2.msra.mxu0 0.0
        %935 = vmatprep.subr.mxu0 0.0
        %936 = vmatpush2.msra.mxu0 0.0
        %937 = vmatprep.subr.mxu0 0.0
        %938 = vmatpush2.msra.mxu0 0.0
        %939 = vmatprep.subr.mxu0 0.0
        %940 = vmatpush2.msra.mxu0 0.0
        %941 = vmatprep.subr.mxu0 0.0
        %942 = vmatpush2.msra.mxu0 0.0
        %943 = vmatprep.subr.mxu0 0.0
        %944 = vmatpush2.msra.mxu0 0.0
        %945 = vmatprep.subr.mxu0 0.0
        %946 = vmatpush2.msra.mxu0 0.0
        %947 = vmatprep.subr.mxu0 0.0
        %948 = vmatpush2.msra.mxu0 0.0
        %949 = vmatprep.subr.mxu0 0.0
        %950 = vmatpush2.msra.mxu0 0.0
        %951 = vmatprep.mubr.f32.mxu0 0.0
        %952 = vmatmul.mubr.f32.gmra.mxu0 %v882
        %v953 = vpop.f32.mrf.mxu0
        %v954 = vadd.f32 0.0, %v953
        %v955 = vpop.f32.mrf.mxu0
        %956 = vdwg.mxu0
        %v957 = vmul.f32 %v625, %v524
        %958 = vrot.lane.b32.xlu0 %v174, 85
        %v959 = vpop.permute.xlu0 %958
        %v960 = vsel %vm193, %v959, 0
        %962 = vmatprep.subr.mxu0 0.0
        %963 = vmatpush1.msra.mxu0 0.0
        %964 = vmatprep.subr.mxu0 0.0
        %965 = vmatpush1.msra.mxu0 0.0
        %966 = vmatprep.subr.mxu0 0.0
        %967 = vmatpush1.msra.mxu0 0.0
        %968 = vmatprep.subr.mxu0 0.0
        %969 = vmatpush1.msra.mxu0 0.0
        %970 = vmatprep.subr.mxu0 0.0
        %971 = vmatpush1.msra.mxu0 0.0
        %972 = vmatprep.subr.mxu0 0.0
        %973 = vmatpush1.msra.mxu0 0.0
        %974 = vmatprep.subr.mxu0 0.0
        %975 = vmatpush1.msra.mxu0 0.0
        %976 = vmatprep.subr.mxu0 0.0
        %977 = vmatpush1.msra.mxu0 0.0
        %978 = vmatprep.subr.mxu0 0.0
        %979 = vmatpush1.msra.mxu0 0.0
        %980 = vmatprep.subr.mxu0 0.0
        %981 = vmatpush1.msra.mxu0 0.0
        %982 = vmatprep.subr.mxu0 0.0
        %983 = vmatpush1.msra.mxu0 0.0
        %984 = vmatprep.subr.mxu0 0.0
        %985 = vmatpush1.msra.mxu0 0.0
        %986 = vmatprep.subr.mxu0 0.0
        %987 = vmatpush1.msra.mxu0 0.0
        %988 = vmatprep.subr.mxu0 0.0
        %989 = vmatpush1.msra.mxu0 0.0
        %990 = vmatprep.subr.mxu0 0.0
        %991 = vmatpush1.msra.mxu0 0.0
        %992 = vmatprep.subr.mxu0 0.0
        %993 = vmatpush1.msra.mxu0 %v957
        %994 = vmatprep.subr.mxu0 0.0
        %995 = vmatpush2.msra.mxu0 0.0
        %996 = vmatprep.subr.mxu0 0.0
        %997 = vmatpush2.msra.mxu0 0.0
        %998 = vmatprep.subr.mxu0 0.0
        %999 = vmatpush2.msra.mxu0 0.0
        %1000 = vmatprep.subr.mxu0 0.0
        %1001 = vmatpush2.msra.mxu0 0.0
        %1002 = vmatprep.subr.mxu0 0.0
        %1003 = vmatpush2.msra.mxu0 0.0
        %1004 = vmatprep.subr.mxu0 0.0
        %1005 = vmatpush2.msra.mxu0 0.0
        %1006 = vmatprep.subr.mxu0 0.0
        %1007 = vmatpush2.msra.mxu0 0.0
        %1008 = vmatprep.subr.mxu0 0.0
        %1009 = vmatpush2.msra.mxu0 0.0
        %1010 = vmatprep.subr.mxu0 0.0
        %1011 = vmatpush2.msra.mxu0 0.0
        %1012 = vmatprep.subr.mxu0 0.0
        %1013 = vmatpush2.msra.mxu0 0.0
        %1014 = vmatprep.subr.mxu0 0.0
        %1015 = vmatpush2.msra.mxu0 0.0
        %1016 = vmatprep.subr.mxu0 0.0
        %1017 = vmatpush2.msra.mxu0 0.0
        %1018 = vmatprep.subr.mxu0 0.0
        %1019 = vmatpush2.msra.mxu0 0.0
        %1020 = vmatprep.subr.mxu0 0.0
        %1021 = vmatpush2.msra.mxu0 0.0
        %1022 = vmatprep.subr.mxu0 0.0
        %1023 = vmatpush2.msra.mxu0 0.0
        %1024 = vmatprep.subr.mxu0 0.0
        %1025 = vmatpush2.msra.mxu0 0.0
        %1026 = vmatprep.mubr.f32.mxu0 0.0
        %1027 = vmatmul.mubr.f32.gmra.mxu0 %v960
        %v1028 = vpop.f32.mrf.mxu0
        %v1029 = vadd.f32 0.0, %v1028
        %v1030 = vpop.f32.mrf.mxu0
        %1031 = vdwg.mxu0
        %v1033 = vrot.slane %v1029, 4
        %v1035 = vadd.f32 %v513, %v1033
        %v1036 = vmul.f32 %v878, %v524
        %1037 = vmatprep.subr.mxu0 0.0
        %1038 = vmatpush1.msra.mxu0 0.0
        %1039 = vmatprep.subr.mxu0 0.0
        %1040 = vmatpush1.msra.mxu0 0.0
        %1041 = vmatprep.subr.mxu0 0.0
        %1042 = vmatpush1.msra.mxu0 0.0
        %1043 = vmatprep.subr.mxu0 0.0
        %1044 = vmatpush1.msra.mxu0 0.0
        %1045 = vmatprep.subr.mxu0 0.0
        %1046 = vmatpush1.msra.mxu0 0.0
        %1047 = vmatprep.subr.mxu0 0.0
        %1048 = vmatpush1.msra.mxu0 0.0
        %1049 = vmatprep.subr.mxu0 0.0
        %1050 = vmatpush1.msra.mxu0 0.0
        %1051 = vmatprep.subr.mxu0 0.0
        %1052 = vmatpush1.msra.mxu0 0.0
        %1053 = vmatprep.subr.mxu0 0.0
        %1054 = vmatpush1.msra.mxu0 0.0
        %1055 = vmatprep.subr.mxu0 0.0
        %1056 = vmatpush1.msra.mxu0 0.0
        %1057 = vmatprep.subr.mxu0 0.0
        %1058 = vmatpush1.msra.mxu0 0.0
        %1059 = vmatprep.subr.mxu0 0.0
        %1060 = vmatpush1.msra.mxu0 0.0
        %1061 = vmatprep.subr.mxu0 0.0
        %1062 = vmatpush1.msra.mxu0 0.0
        %1063 = vmatprep.subr.mxu0 0.0
        %1064 = vmatpush1.msra.mxu0 0.0
        %1065 = vmatprep.subr.mxu0 0.0
        %1066 = vmatpush1.msra.mxu0 0.0
        %1067 = vmatprep.subr.mxu0 0.0
        %1068 = vmatpush1.msra.mxu0 %v1036
        %1069 = vmatprep.subr.mxu0 0.0
        %1070 = vmatpush2.msra.mxu0 0.0
        %1071 = vmatprep.subr.mxu0 0.0
        %1072 = vmatpush2.msra.mxu0 0.0
        %1073 = vmatprep.subr.mxu0 0.0
        %1074 = vmatpush2.msra.mxu0 0.0
        %1075 = vmatprep.subr.mxu0 0.0
        %1076 = vmatpush2.msra.mxu0 0.0
        %1077 = vmatprep.subr.mxu0 0.0
        %1078 = vmatpush2.msra.mxu0 0.0
        %1079 = vmatprep.subr.mxu0 0.0
        %1080 = vmatpush2.msra.mxu0 0.0
        %1081 = vmatprep.subr.mxu0 0.0
        %1082 = vmatpush2.msra.mxu0 0.0
        %1083 = vmatprep.subr.mxu0 0.0
        %1084 = vmatpush2.msra.mxu0 0.0
        %1085 = vmatprep.subr.mxu0 0.0
        %1086 = vmatpush2.msra.mxu0 0.0
        %1087 = vmatprep.subr.mxu0 0.0
        %1088 = vmatpush2.msra.mxu0 0.0
        %1089 = vmatprep.subr.mxu0 0.0
        %1090 = vmatpush2.msra.mxu0 0.0
        %1091 = vmatprep.subr.mxu0 0.0
        %1092 = vmatpush2.msra.mxu0 0.0
        %1093 = vmatprep.subr.mxu0 0.0
        %1094 = vmatpush2.msra.mxu0 0.0
        %1095 = vmatprep.subr.mxu0 0.0
        %1096 = vmatpush2.msra.mxu0 0.0
        %1097 = vmatprep.subr.mxu0 0.0
        %1098 = vmatpush2.msra.mxu0 0.0
        %1099 = vmatprep.subr.mxu0 0.0
        %1100 = vmatpush2.msra.mxu0 0.0
        %1101 = vmatprep.mubr.f32.mxu0 0.0
        %1102 = vmatmul.mubr.f32.gmra.mxu0 %v960
        %v1103 = vpop.f32.mrf.mxu0
        %v1104 = vadd.f32 0.0, %v1103
        %v1105 = vpop.f32.mrf.mxu0
        %1106 = vdwg.mxu0
        %v1108 = vrot.slane %v1104, 4
        %v1110 = vadd.f32 %v513, %v1108
        %v1112 = vrot.slane %v954, 4
        %v1114 = vadd.f32 %v1110, %v1112
        %v1115 = vlaneseq
        %v1116 = vshrl.u32 %v1115, 7
        %vm1117 = vcmp.eq.s32.totalorder %v1116, 0
        %v1118 = vsel %vm1117, 1, 0
        %vm1119 = vcmp.eq.s32.totalorder %v1118, 1
        %v1120 = vlaneseq
        %v1121 = vshrl.u32 %v1120, 7
        %v1122 = vsub.s32 4, %v1121
        %v1123 = vrot.slane %v1035, %v1122
        %v1124 = vlaneseq
        %v1125 = vshrl.u32 %v1124, 7
        %v1126 = vsub.s32 4, %v1125
        %v1127 = vrot.slane %v1114, %v1126
        %v1128 = vsel %vm1119, %v1123, %v1127
        %v1129 = vand.u32 2147483647, %v1128
        %v1130 = vsub.f32 0.0, %v1129
        %v1131 = vmul.f32 %v1130, 1.442695
        %v1132 = vpow.pop %v1131
        %v1133 = vadd.f32 %v1132, 1.0
        %v1134 = vrcp.pop %v1133
        %v1135 = vmul.f32 1.0, %v1134
        %v1136 = vmax.f32 %v1128, 0.0
        %v1137 = vlog2.pop %v1133
        %v1138 = vmul.f32 %v1137, 0.6931472
        %v1139 = vadd.f32 %v1136, %v1138
        %vm1140 = vcmp.ge.f32.partialorder %v1128, 0.0
        %v1141 = vmul.f32 %v1132, %v1135
        %v1142 = vsel %vm1140, %v1135, %v1141
        %v1143 = vmul.f32 %v524, %v628
        %1144 = vset.pattern.permute.xlu0 71
        %1145 = vperm.xlu0 %1144, %v174
        %v1146 = vpop.permute.xlu0 %1145
        %v1148 = vmul.f32 %v1143, %v1146
        %1149 = vrot.lane.b32.xlu0 %v174, 101
        %v1150 = vpop.permute.xlu0 %1149
        %1151 = vrot.lane.b32.xlu0 %v175, 101
        %v1152 = vpop.permute.xlu0 %1151
        %v1153 = vsel %vm193, %v1150, 0
        %v1155 = vsel %vm193, %v1152, 0
        %1157 = vmatprep.subr.mxu0 0.0
        %1158 = vmatpush1.msra.mxu0 0.0
        %1159 = vmatprep.subr.mxu0 0.0
        %1160 = vmatpush1.msra.mxu0 0.0
        %1161 = vmatprep.subr.mxu0 0.0
        %1162 = vmatpush1.msra.mxu0 0.0
        %1163 = vmatprep.subr.mxu0 0.0
        %1164 = vmatpush1.msra.mxu0 0.0
        %1165 = vmatprep.subr.mxu0 0.0
        %1166 = vmatpush1.msra.mxu0 0.0
        %1167 = vmatprep.subr.mxu0 0.0
        %1168 = vmatpush1.msra.mxu0 0.0
        %1169 = vmatprep.subr.mxu0 0.0
        %1170 = vmatpush1.msra.mxu0 0.0
        %1171 = vmatprep.subr.mxu0 0.0
        %1172 = vmatpush1.msra.mxu0 0.0
        %1173 = vmatprep.subr.mxu0 0.0
        %1174 = vmatpush1.msra.mxu0 0.0
        %1175 = vmatprep.subr.mxu0 0.0
        %1176 = vmatpush1.msra.mxu0 0.0
        %1177 = vmatprep.subr.mxu0 0.0
        %1178 = vmatpush1.msra.mxu0 0.0
        %1179 = vmatprep.subr.mxu0 0.0
        %1180 = vmatpush1.msra.mxu0 0.0
        %1181 = vmatprep.subr.mxu0 0.0
        %1182 = vmatpush1.msra.mxu0 0.0
        %1183 = vmatprep.subr.mxu0 0.0
        %1184 = vmatpush1.msra.mxu0 0.0
        %1185 = vmatprep.subr.mxu0 0.0
        %1186 = vmatpush1.msra.mxu0 0.0
        %1187 = vmatprep.subr.mxu0 0.0
        %1188 = vmatpush1.msra.mxu0 %v1148
        %1189 = vmatprep.subr.mxu0 0.0
        %1190 = vmatpush2.msra.mxu0 0.0
        %1191 = vmatprep.subr.mxu0 0.0
        %1192 = vmatpush2.msra.mxu0 0.0
        %1193 = vmatprep.subr.mxu0 0.0
        %1194 = vmatpush2.msra.mxu0 0.0
        %1195 = vmatprep.subr.mxu0 0.0
        %1196 = vmatpush2.msra.mxu0 0.0
        %1197 = vmatprep.subr.mxu0 0.0
        %1198 = vmatpush2.msra.mxu0 0.0
        %1199 = vmatprep.subr.mxu0 0.0
        %1200 = vmatpush2.msra.mxu0 0.0
        %1201 = vmatprep.subr.mxu0 0.0
        %1202 = vmatpush2.msra.mxu0 0.0
        %1203 = vmatprep.subr.mxu0 0.0
        %1204 = vmatpush2.msra.mxu0 0.0
        %1205 = vmatprep.subr.mxu0 0.0
        %1206 = vmatpush2.msra.mxu0 0.0
        %1207 = vmatprep.subr.mxu0 0.0
        %1208 = vmatpush2.msra.mxu0 0.0
        %1209 = vmatprep.subr.mxu0 0.0
        %1210 = vmatpush2.msra.mxu0 0.0
        %1211 = vmatprep.subr.mxu0 0.0
        %1212 = vmatpush2.msra.mxu0 0.0
        %1213 = vmatprep.subr.mxu0 0.0
        %1214 = vmatpush2.msra.mxu0 0.0
        %1215 = vmatprep.subr.mxu0 0.0
        %1216 = vmatpush2.msra.mxu0 0.0
        %1217 = vmatprep.subr.mxu0 0.0
        %1218 = vmatpush2.msra.mxu0 0.0
        %1219 = vmatprep.subr.mxu0 0.0
        %1220 = vmatpush2.msra.mxu0 0.0
        %1221 = vmatprep.mubr.f32.mxu0 0.0
        %1222 = vmatmul.mubr.f32.gmra.mxu0 %v1153
        %v1223 = vpop.f32.mrf.mxu0
        %v1224 = vadd.f32 0.0, %v1223
        %v1225 = vpop.f32.mrf.mxu0
        %1226 = vmatprep.mubr.f32.mxu0 0.0
        %1227 = vmatmul.mubr.f32.gmra.mxu0 %v1155
        %v1228 = vpop.f32.mrf.mxu0
        %v1229 = vadd.f32 0.0, %v1228
        %v1230 = vpop.f32.mrf.mxu0
        %1231 = vdwg.mxu0
        %v1232 = vmul.f32 %v1224, %v415
        %v1233 = vmul.f32 %v1232, %v538
        %1234 = vrot.lane.b32.xlu0 %v174, 65
        %v1235 = vpop.permute.xlu0 %1234
        %v1236 = vsel %vm193, %v1235, 0
        %1238 = vmatprep.subr.mxu0 0.0
        %1239 = vmatpush1.msra.mxu0 0.0
        %1240 = vmatprep.subr.mxu0 0.0
        %1241 = vmatpush1.msra.mxu0 0.0
        %1242 = vmatprep.subr.mxu0 0.0
        %1243 = vmatpush1.msra.mxu0 0.0
        %1244 = vmatprep.subr.mxu0 0.0
        %1245 = vmatpush1.msra.mxu0 0.0
        %1246 = vmatprep.subr.mxu0 0.0
        %1247 = vmatpush1.msra.mxu0 0.0
        %1248 = vmatprep.subr.mxu0 0.0
        %1249 = vmatpush1.msra.mxu0 0.0
        %1250 = vmatprep.subr.mxu0 0.0
        %1251 = vmatpush1.msra.mxu0 0.0
        %1252 = vmatprep.subr.mxu0 0.0
        %1253 = vmatpush1.msra.mxu0 0.0
        %1254 = vmatprep.subr.mxu0 0.0
        %1255 = vmatpush1.msra.mxu0 0.0
        %1256 = vmatprep.subr.mxu0 0.0
        %1257 = vmatpush1.msra.mxu0 0.0
        %1258 = vmatprep.subr.mxu0 0.0
        %1259 = vmatpush1.msra.mxu0 0.0
        %1260 = vmatprep.subr.mxu0 0.0
        %1261 = vmatpush1.msra.mxu0 0.0
        %1262 = vmatprep.subr.mxu0 0.0
        %1263 = vmatpush1.msra.mxu0 0.0
        %1264 = vmatprep.subr.mxu0 0.0
        %1265 = vmatpush1.msra.mxu0 0.0
        %1266 = vmatprep.subr.mxu0 0.0
        %1267 = vmatpush1.msra.mxu0 0.0
        %1268 = vmatprep.subr.mxu0 0.0
        %1269 = vmatpush1.msra.mxu0 %v1233
        %1270 = vmatprep.subr.mxu0 0.0
        %1271 = vmatpush2.msra.mxu0 0.0
        %1272 = vmatprep.subr.mxu0 0.0
        %1273 = vmatpush2.msra.mxu0 0.0
        %1274 = vmatprep.subr.mxu0 0.0
        %1275 = vmatpush2.msra.mxu0 0.0
        %1276 = vmatprep.subr.mxu0 0.0
        %1277 = vmatpush2.msra.mxu0 0.0
        %1278 = vmatprep.subr.mxu0 0.0
        %1279 = vmatpush2.msra.mxu0 0.0
        %1280 = vmatprep.subr.mxu0 0.0
        %1281 = vmatpush2.msra.mxu0 0.0
        %1282 = vmatprep.subr.mxu0 0.0
        %1283 = vmatpush2.msra.mxu0 0.0
        %1284 = vmatprep.subr.mxu0 0.0
        %1285 = vmatpush2.msra.mxu0 0.0
        %1286 = vmatprep.subr.mxu0 0.0
        %1287 = vmatpush2.msra.mxu0 0.0
        %1288 = vmatprep.subr.mxu0 0.0
        %1289 = vmatpush2.msra.mxu0 0.0
        %1290 = vmatprep.subr.mxu0 0.0
        %1291 = vmatpush2.msra.mxu0 0.0
        %1292 = vmatprep.subr.mxu0 0.0
        %1293 = vmatpush2.msra.mxu0 0.0
        %1294 = vmatprep.subr.mxu0 0.0
        %1295 = vmatpush2.msra.mxu0 0.0
        %1296 = vmatprep.subr.mxu0 0.0
        %1297 = vmatpush2.msra.mxu0 0.0
        %1298 = vmatprep.subr.mxu0 0.0
        %1299 = vmatpush2.msra.mxu0 0.0
        %1300 = vmatprep.subr.mxu0 0.0
        %1301 = vmatpush2.msra.mxu0 0.0
        %1302 = vmatprep.mubr.f32.mxu0 0.0
        %1303 = vmatmul.mubr.f32.gmra.mxu0 %v1236
        %v1304 = vpop.f32.mrf.mxu0
        %v1305 = vadd.f32 0.0, %v1304
        %v1306 = vpop.f32.mrf.mxu0
        %1307 = vdwg.mxu0
        %1308 = vset.pattern.permute.xlu0 72
        %1309 = vperm.xlu0 %1308, %v174
        %v1310 = vpop.permute.xlu0 %1309
        %v1312 = vmul.f32 %v513, %v1310
        %v1313 = vmul.f32 %v404, %v1229
        %v1314 = vadd.f32 %v1312, %v1313
        %v1315 = vmul.f32 %v277, %v1305
        %v1316 = vadd.f32 %v1314, %v1315
        %v1317 = vlaneseq
        %v1318 = vshrl.u32 %v1317, 7
        %v1319 = vsub.s32 0, %v1318
        %v1320 = vrot.slane %v1142, %v1319
        %v1321 = vmul.f32 %v1320, %v1316
        %v1322 = vmul.f32 %v173, %v1321
        %v1323 = vsel %vm635, %v1322, 0.0
        %v1324 = vrot.slane %v1323, 4
        %v1325 = vadd.f32 %v1323, %v1324
        %v1326 = vrot.slane %v1325, 2
        %v1327 = vadd.f32 %v1325, %v1326
        %v1328 = vrot.slane %v1327, 1
        %v1329 = vadd.f32 %v1327, %v1328
        %v1331 = vrot.slane %v1139, 7
        %v1333 = vsub.f32 %v1139, %v1331
        %v1334 = vsub.f32 %v1333, %v1329
        %1335 = vst [vmem:[%s172 - $0x1] sm:$0x2] %v1334
        %s1336 = sand.u32 %s75, 1
        %s1337 = scalar_lea.sflag [#allocation4], %s1336
        %s1338 = sand.u32 %s75, 1
        %s1339 = scalar_lea.vmem [#allocation7], %s1338
        // Predicated region
        $region37: #{tpu_custom_call.1} parent=27 // pred_check
          %p1340 = pneg %p85
        $region38: #{tpu_custom_call.1} parent=27 // pred_check_branch
          %1342 = sbr.rel (%p1340) target = $region40
        $region39: #{tpu_custom_call.1} parent=27 // pred_region
          %s1344 = ssub.s32 16, 16
          %1345 = vsyncadd %s1337, %s1344
          %s1346 = smul.addr %s20, 16
          %s1347 = scalar_lea.hbm %s2, %s1346
          %s1349 = sshll.u32 %s1339, 4
          %s1350 = int_to_ptr.vmem [resolvable:$true] %s1349
          %1352 = dma.vmem_to_hbm [thread:$0]  %s1350, 16, %s1347, %s1337
        $region40: #{tpu_custom_call.1} parent=27 // pred_fallthru
          _
      $region28: #{tpu_custom_call.1} parent=5 // pred_fallthru
        _
      %p1353 = scmp.le.s32.totalorder 2, %s15
      // Predicated region
      $region41: #{tpu_custom_call.1} parent=5 // pred_check
        %p1354 = pneg %p1353
      $region42: #{tpu_custom_call.1} parent=5 // pred_check_branch
        %1356 = sbr.rel (%p1354) target = $region44
      $region43: #{tpu_custom_call.1} parent=5 // pred_region
        %s1357 = ssub.s32 %s15, 2
        // Predicated region
        $region45: #{tpu_custom_call.1} parent=43 // pred_check
          %p1358 = pneg %p91
        $region46: #{tpu_custom_call.1} parent=43 // pred_check_branch
          %1360 = sbr.rel (%p1358) target = $region48
        $region47: #{tpu_custom_call.1} parent=43 // pred_region
          %s1361 = sand.u32 %s76, 1
          %s1362 = scalar_lea.sflag [#allocation4], %s1361
          %s1363 = sand.u32 %s76, 1
          %s1364 = scalar_lea.vmem [#allocation7], %s1363
          %1365 = dma.done %s1362, 16
        $region48: #{tpu_custom_call.1} parent=43 // pred_fallthru
          _
      $region44: #{tpu_custom_call.1} parent=5 // pred_fallthru
        _
    $region6: #{tpu_custom_call.1} parent=1 // loop_footer
      %s19 = sadd.s32 1, %s15
    $region7: #{tpu_custom_call.1} parent=1 // loop_footer_branch
      %14 = sbr.rel target = $region3
    $region8: #{tpu_custom_call.1} parent=1 // loop_exit
      _
    %1366 = vsyncpa [#allocation3], 1
    %s1367 = scalar_lea.sflag [#allocation3], 1
    %1368 = vsyncpa %s1367, 1
    %1369 = vsyncpa [#allocation6], 1
    %1370 = vsyncpa [#allocation4], 1
    %s1371 = scalar_lea.sflag [#allocation4], 1
    %1372 = vsyncpa %s1371, 1

</llo_original>
